<compile_context>
chip_gen: v6e
topology: v6e:2x2x1
jax: 0.10.0
libtpu: 0.0.40
codegen_flags: <defaults>
</compile_context>

<pallas_src>
import functools
import math

import jax
import jax.numpy as jnp
import numpy as np
from jax.experimental import pallas as pl
from jax.experimental.pallas import tpu as pltpu

BN_EPS = 1e-5


# ----------------------------- Pallas kernel ------------------------------


def _fused_layer_kernel(w_ref, x_ref, g_ref, b_ref, o_ref, *scratch,
                        inv_m, nsteps):
    """Fused Conv(as matmul) + BatchNorm(training stats) + ReLU, transposed layout.

    w_ref   : (cout, K)   conv weights, K ordered (kh, kw, cin)
    x_ref   : (K, tm)     im2col patches tile (pixels on the lane axis)
    g_ref   : (cout, 1)   BN gamma
    b_ref   : (cout, 1)   BN beta
    o_ref   : (cout, M)   full layer output, VMEM-resident across the grid
    scratch : ()                          when nsteps == 1
              (sum_ref, ssq_ref) (cout,1) when nsteps  > 1
    """
    if nsteps == 1:
        # Fast path: whole layer in one grid step.  Conv, stats, BN and ReLU
        # from the accumulator in one pass; no scratch, no output readback.
        acc = jnp.dot(w_ref[...], x_ref[...], preferred_element_type=jnp.float32)
        mean = jnp.sum(acc, axis=1, keepdims=True) * inv_m
        var = jnp.maximum(
            jnp.sum(acc * acc, axis=1, keepdims=True) * inv_m - mean * mean, 0.0)
        scale = g_ref[...] * jax.lax.rsqrt(var + BN_EPS)
        bias = b_ref[...] - mean * scale
        o_ref[...] = jnp.maximum(acc * scale + bias, 0.0)
        return

    sum_ref, ssq_ref = scratch
    i = pl.program_id(0)
    tm = x_ref.shape[1]

    @pl.when(i == 0)
    def _init():
        sum_ref[...] = jnp.zeros_like(sum_ref)
        ssq_ref[...] = jnp.zeros_like(ssq_ref)

    # Conv as matmul on the MXU; result tile is lane-dense (cout, tm).
    acc = jnp.dot(w_ref[...], x_ref[...], preferred_element_type=jnp.float32)
    sum_ref[...] += jnp.sum(acc, axis=1, keepdims=True)
    ssq_ref[...] += jnp.sum(acc * acc, axis=1, keepdims=True)

    start = pl.multiple_of(i * tm, tm)
    o_ref[:, pl.ds(start, tm)] = acc

    # Finalize on the last step: fold stats into per-channel scale/bias and
    # apply BN + ReLU over the whole VMEM-resident output.
    @pl.when(i == nsteps - 1)
    def _finalize():
        mean = sum_ref[...] * inv_m
        var = jnp.maximum(ssq_ref[...] * inv_m - mean * mean, 0.0)  # clamp cancellation
        scale = g_ref[...] * jax.lax.rsqrt(var + BN_EPS)
        bias = b_ref[...] - mean * scale
        o_ref[...] = jnp.maximum(o_ref[...] * scale + bias, 0.0)


# ------------------------------- JAX glue -----------------------------------


def _pick_tile(m, k_dim, budget_bytes=12 * 1024 * 1024):
    """Largest lane tile: whole-m if the (double-buffered) patches tile fits, else a
    128-multiple divisor of m under the budget."""
    if 2 * k_dim * m * 4 <= budget_bytes:
        return m
    cap = max(128, (budget_bytes // (2 * k_dim * 4)) // 128 * 128)
    tm = cap
    while tm >= 128:
        if m % tm == 0:
            return tm
        tm -= 128
    # TODO(synk): pad m for ragged pixel counts instead of one giant tile.
    return m


def _im2col_t(x_cnhw, k=4, s=2, p=1):
    """(C, N, H, W) -> (k*k*C, N*Ho*Wo) patches; feature axis ordered (kh, kw, cin)."""
    c, n, h, w = x_cnhw.shape
    ho = (h + 2 * p - k) // s + 1
    wo = (w + 2 * p - k) // s + 1
    xp = jnp.pad(x_cnhw, ((0, 0), (0, 0), (p, p), (p, p)))
    taps = [xp[:, :, kh:kh + s * ho:s, kw:kw + s * wo:s]
            for kh in range(k) for kw in range(k)]          # each (C, N, Ho, Wo)
    patches = jnp.stack(taps, axis=0)                       # (k*k, C, N, Ho, Wo)
    return patches.reshape(k * k * c, n * ho * wo), ho, wo


def conv_bn_relu_layer_t(x_cnhw, w_t, gamma_col, beta_col):
    """One fused Conv2d(4,2,1,bias=False)+BN(train stats)+ReLU layer on a CNHW map."""
    n = x_cnhw.shape[1]
    cout, k_dim = w_t.shape
    patches_t, ho, wo = _im2col_t(x_cnhw)                   # (K, m), m = n*ho*wo
    m = patches_t.shape[1]
    tm = _pick_tile(m, k_dim)
    nsteps = m // tm

    scratch_shapes = []
    if nsteps > 1:
        scratch_shapes = [pltpu.VMEM((cout, 1), jnp.float32),
                          pltpu.VMEM((cout, 1), jnp.float32)]

    out = pl.pallas_call(
        functools.partial(_fused_layer_kernel, inv_m=1.0 / m, nsteps=nsteps),
        out_shape=jax.ShapeDtypeStruct((cout, m), jnp.float32),
        grid_spec=pltpu.PrefetchScalarGridSpec(
            num_scalar_prefetch=0,
            grid=(nsteps,),
            in_specs=[
                pl.BlockSpec((cout, k_dim), lambda i: (0, 0)),
                pl.BlockSpec((k_dim, tm), lambda i: (0, i)),
                pl.BlockSpec((cout, 1), lambda i: (0, 0)),
                pl.BlockSpec((cout, 1), lambda i: (0, 0)),
            ],
            out_specs=pl.BlockSpec((cout, m), lambda i: (0, 0)),  # VMEM-resident
            scratch_shapes=scratch_shapes,
        ),
        compiler_params=pltpu.CompilerParams(
            dimension_semantics=("arbitrary",),
            vmem_limit_bytes=32 * 1024 * 1024,
        ),
    )(w_t, patches_t, gamma_col, beta_col)

    return out.reshape(cout, n, ho, wo)


class EncoderBNPallas:
    """Mirrors EncoderBN.__init__ layer construction; deterministic synthetic params."""

    def __init__(self, in_channels, stem_channels, final_feature_width, key):
        layer_io = [(in_channels, stem_channels)]
        feature_width = 64 // 2
        channels = stem_channels
        while True:
            layer_io.append((channels, channels * 2))
            channels *= 2
            feature_width //= 2
            if feature_width == final_feature_width:
                break
        self.last_channels = channels

        # Params stored both in HWIO / vector form (for the reference) and in the
        # kernel's pre-transposed layout (avoids per-call glue ops).
        self.weights, self.gammas, self.betas = [], [], []
        self.w_t, self.gammas_col, self.betas_col = [], [], []
        for cin, cout in layer_io:
            key, kw, kg, kb = jax.random.split(key, 4)
            fan_in = cin * 16
            w = jax.random.normal(kw, (4, 4, cin, cout), jnp.float32) / math.sqrt(fan_in)
            g = 1.0 + 0.1 * jax.random.normal(kg, (cout,), jnp.float32)
            b = 0.1 * jax.random.normal(kb, (cout,), jnp.float32)
            self.weights.append(w)
            self.gammas.append(g)
            self.betas.append(b)
            self.w_t.append(w.reshape(16 * cin, cout).T)      # (cout, K)
            self.gammas_col.append(g.reshape(cout, 1))
            self.betas_col.append(b.reshape(cout, 1))
        # TODO(synk): running_mean / running_var updates are not tracked (they do
        # not affect the forward output).

    def __call__(self, x):
        # x: (B, L, C, H, W) float32
        b, l = x.shape[0], x.shape[1]
        y = x.reshape(-1, *x.shape[2:])           # (N, C, H, W)
        y = jnp.transpose(y, (1, 0, 2, 3))        # (C, N, H, W)  transposed layout
        for w_t, g, bt in zip(self.w_t, self.gammas_col, self.betas_col):
            y = conv_bn_relu_layer_t(y, w_t, g, bt)
        y = jnp.transpose(y, (1, 0, 2, 3))        # (N, C, Hf, Wf)  torch order
        return y.reshape(b, l, -1)


# ------------------------- pure-JAX reference ---------------------------------


def reference_forward(x, enc):
    batch_size = x.shape[0]
    y = x.reshape(-1, *x.shape[2:])  # NCHW
    for w, g, b in zip(enc.weights, enc.gammas, enc.betas):
        w_oihw = jnp.transpose(w, (3, 2, 0, 1))
        y = jax.lax.conv_general_dilated(
            y, w_oihw, window_strides=(2, 2), padding=((1, 1), (1, 1)),
            dimension_numbers=("NCHW", "OIHW", "NCHW"))
        mean = y.mean(axis=(0, 2, 3), keepdims=True)
        var = y.var(axis=(0, 2, 3), keepdims=True)  # biased, as PyTorch BN uses
        y = (y - mean) * jax.lax.rsqrt(var + BN_EPS)
        y = y * g[None, :, None, None] + b[None, :, None, None]
        y = jnp.maximum(y, 0.0)
    return y.reshape(batch_size, -1, y.shape[1] * y.shape[2] * y.shape[3])


# ----------------------------------- main --------------------------------------

if __name__ == "__main__":
    key = jax.random.PRNGKey(0)
    key, kx, kp = jax.random.split(key, 3)

    B, L = 2, 2
    in_channels, stem_channels, final_feature_width = 3, 8, 8
    H = W = 64  # backbone hardcodes feature_width = 64 // 2

    x = jax.random.normal(kx, (B, L, in_channels, H, W), jnp.float32)

    enc = EncoderBNPallas(in_channels, stem_channels, final_feature_width, kp)

    fwd = jax.jit(lambda inp: enc(inp))
    out = jax.block_until_ready(fwd(x))

    # sanity checks vs pure-JAX reference
    ref = jax.block_until_ready(reference_forward(x, enc))
    expected_feat = enc.last_channels * final_feature_width * final_feature_width
    assert out.shape == (B, L, expected_feat), out.shape
    np.testing.assert_allclose(np.asarray(out), np.asarray(ref), rtol=1e-3, atol=1e-3)

    print("KERNEL_OK")
</pallas_src>

<mosaic_0001>
module attributes {stable_mosaic.version = 11 : i64} {
  func.func @_fused_layer_kernel(%arg0: i32, %arg1: memref<8x48xf32, #tpu.memory_space<vmem>>, %arg2: memref<48x4096xf32, #tpu.memory_space<vmem>>, %arg3: memref<8x1xf32, #tpu.memory_space<vmem>>, %arg4: memref<8x1xf32, #tpu.memory_space<vmem>>, %arg5: memref<8x4096xf32, #tpu.memory_space<vmem>>) attributes {dimension_semantics = [#tpu.dimension_semantics<arbitrary>], iteration_bounds = array<i64: 1>, scalar_prefetch = 0 : i64, scratch_operands = 0 : i64, tpu.core_type = #tpu.core_type<tc>, window_params = [{pipeline_mode = #tpu.pipeline_mode<synchronous>, transform_indices = @transform_0, window_bounds = array<i64: 8, 48>}, {transform_indices = @transform_1, window_bounds = array<i64: 48, 4096>}, {pipeline_mode = #tpu.pipeline_mode<synchronous>, transform_indices = @transform_2, window_bounds = array<i64: 8, 1>}, {pipeline_mode = #tpu.pipeline_mode<synchronous>, transform_indices = @transform_3, window_bounds = array<i64: 8, 1>}, {pipeline_mode = #tpu.pipeline_mode<synchronous>, transform_indices = @transform_4, window_bounds = array<i64: 8, 4096>}]} {
    %c0 = arith.constant 0 : index
    %c0_0 = arith.constant 0 : index
    %0 = vector.load %arg1[%c0, %c0_0] : memref<8x48xf32, #tpu.memory_space<vmem>>, vector<8x48xf32>
    %c0_1 = arith.constant 0 : index
    %c0_2 = arith.constant 0 : index
    %1 = vector.load %arg2[%c0_1, %c0_2] : memref<48x4096xf32, #tpu.memory_space<vmem>>, vector<48x4096xf32>
    %cst = arith.constant dense<0.000000e+00> : vector<8x4096xf32>
    %2 = tpu.matmul %0, %1, %cst {dimension_numbers = #tpu.dot_dimension_numbers<[1], [0], [0], [1], [0, 0, 1, 1], [], []>} : vector<8x48xf32>, vector<48x4096xf32>, vector<8x4096xf32> -> vector<8x4096xf32>
    %cst_3 = arith.constant dense<0.000000e+00> : vector<8xf32>
    %3 = vector.multi_reduction <add>, %2, %cst_3 [1] : vector<8x4096xf32> to vector<8xf32>
    %4 = vector.shape_cast %3 : vector<8xf32> to vector<8x1xf32>
    %cst_4 = arith.constant 2.44140625E-4 : f32
    %5 = vector.broadcast %cst_4 : f32 to vector<8x1xf32>
    %6 = arith.mulf %4, %5 : vector<8x1xf32>
    %7 = arith.mulf %2, %2 : vector<8x4096xf32>
    %cst_5 = arith.constant dense<0.000000e+00> : vector<8xf32>
    %8 = vector.multi_reduction <add>, %7, %cst_5 [1] : vector<8x4096xf32> to vector<8xf32>
    %9 = vector.shape_cast %8 : vector<8xf32> to vector<8x1xf32>
    %cst_6 = arith.constant 2.44140625E-4 : f32
    %10 = vector.broadcast %cst_6 : f32 to vector<8x1xf32>
    %11 = arith.mulf %9, %10 : vector<8x1xf32>
    %12 = arith.mulf %6, %6 : vector<8x1xf32>
    %13 = arith.subf %11, %12 : vector<8x1xf32>
    %cst_7 = arith.constant 0.000000e+00 : f32
    %14 = vector.broadcast %cst_7 : f32 to vector<8x1xf32>
    %15 = arith.maximumf %13, %14 : vector<8x1xf32>
    %c0_8 = arith.constant 0 : index
    %c0_9 = arith.constant 0 : index
    %16 = vector.load %arg3[%c0_8, %c0_9] : memref<8x1xf32, #tpu.memory_space<vmem>>, vector<8x1xf32>
    %cst_10 = arith.constant 9.99999974E-6 : f32
    %17 = vector.broadcast %cst_10 : f32 to vector<8x1xf32>
    %18 = arith.addf %15, %17 : vector<8x1xf32>
    %19 = math.rsqrt %18 : vector<8x1xf32>
    %20 = arith.mulf %16, %19 : vector<8x1xf32>
    %c0_11 = arith.constant 0 : index
    %c0_12 = arith.constant 0 : index
    %21 = vector.load %arg4[%c0_11, %c0_12] : memref<8x1xf32, #tpu.memory_space<vmem>>, vector<8x1xf32>
    %22 = arith.mulf %6, %20 : vector<8x1xf32>
    %23 = arith.subf %21, %22 : vector<8x1xf32>
    %24 = vector.broadcast %20 : vector<8x1xf32> to vector<8x4096xf32>
    %25 = arith.mulf %2, %24 : vector<8x4096xf32>
    %26 = vector.broadcast %23 : vector<8x1xf32> to vector<8x4096xf32>
    %27 = arith.addf %25, %26 : vector<8x4096xf32>
    %cst_13 = arith.constant 0.000000e+00 : f32
    %28 = vector.broadcast %cst_13 : f32 to vector<8x4096xf32>
    %29 = arith.maximumf %27, %28 : vector<8x4096xf32>
    %c0_14 = arith.constant 0 : index
    %c0_15 = arith.constant 0 : index
    %30 = vector.load %arg5[%c0_14, %c0_15] : memref<8x4096xf32, #tpu.memory_space<vmem>>, vector<8x4096xf32>
    tpu.vector_store %arg5[%c0_14, %c0_15], %29 {strides = array<i32>} : memref<8x4096xf32, #tpu.memory_space<vmem>>, vector<8x4096xf32>,
    return
  }
  func.func @transform_0(%arg0: i32) -> (i32, i32) {
    %c0_i32 = arith.constant 0 : i32
    %c0_i32_0 = arith.constant 0 : i32
    %c0_i32_1 = arith.constant 0 : i32
    return %c0_i32, %c0_i32_0 : i32, i32
  }
  func.func @transform_1(%arg0: i32) -> (i32, i32) {
    %c0_i32 = arith.constant 0 : i32
    %c0_i32_0 = arith.constant 0 : i32
    return %c0_i32, %arg0 : i32, i32
  }
  func.func @transform_2(%arg0: i32) -> (i32, i32) {
    %c0_i32 = arith.constant 0 : i32
    %c0_i32_0 = arith.constant 0 : i32
    %c0_i32_1 = arith.constant 0 : i32
    return %c0_i32, %c0_i32_0 : i32, i32
  }
  func.func @transform_3(%arg0: i32) -> (i32, i32) {
    %c0_i32 = arith.constant 0 : i32
    %c0_i32_0 = arith.constant 0 : i32
    %c0_i32_1 = arith.constant 0 : i32
    return %c0_i32, %c0_i32_0 : i32, i32
  }
  func.func @transform_4(%arg0: i32) -> (i32, i32) {
    %c0_i32 = arith.constant 0 : i32
    %c0_i32_0 = arith.constant 0 : i32
    %c0_i32_1 = arith.constant 0 : i32
    return %c0_i32, %c0_i32_0 : i32, i32
  }
}

module attributes {stable_mosaic.version = 11 : i64} {
  func.func @_fused_layer_kernel(%arg0: i32, %arg1: memref<16x128xf32, #tpu.memory_space<vmem>>, %arg2: memref<128x1024xf32, #tpu.memory_space<vmem>>, %arg3: memref<16x1xf32, #tpu.memory_space<vmem>>, %arg4: memref<16x1xf32, #tpu.memory_space<vmem>>, %arg5: memref<16x1024xf32, #tpu.memory_space<vmem>>) attributes {dimension_semantics = [#tpu.dimension_semantics<arbitrary>], iteration_bounds = array<i64: 1>, scalar_prefetch = 0 : i64, scratch_operands = 0 : i64, tpu.core_type = #tpu.core_type<tc>, window_params = [{pipeline_mode = #tpu.pipeline_mode<synchronous>, transform_indices = @transform_0, window_bounds = array<i64: 16, 128>}, {transform_indices = @transform_1, window_bounds = array<i64: 128, 1024>}, {pipeline_mode = #tpu.pipeline_mode<synchronous>, transform_indices = @transform_2, window_bounds = array<i64: 16, 1>}, {pipeline_mode = #tpu.pipeline_mode<synchronous>, transform_indices = @transform_3, window_bounds = array<i64: 16, 1>}, {pipeline_mode = #tpu.pipeline_mode<synchronous>, transform_indices = @transform_4, window_bounds = array<i64: 16, 1024>}]} {
    %c0 = arith.constant 0 : index
    %c0_0 = arith.constant 0 : index
    %0 = vector.load %arg1[%c0, %c0_0] : memref<16x128xf32, #tpu.memory_space<vmem>>, vector<16x128xf32>
    %c0_1 = arith.constant 0 : index
    %c0_2 = arith.constant 0 : index
    %1 = vector.load %arg2[%c0_1, %c0_2] : memref<128x1024xf32, #tpu.memory_space<vmem>>, vector<128x1024xf32>
    %cst = arith.constant dense<0.000000e+00> : vector<16x1024xf32>
    %2 = tpu.matmul %0, %1, %cst {dimension_numbers = #tpu.dot_dimension_numbers<[1], [0], [0], [1], [0, 0, 1, 1], [], []>} : vector<16x128xf32>, vector<128x1024xf32>, vector<16x1024xf32> -> vector<16x1024xf32>
    %cst_3 = arith.constant dense<0.000000e+00> : vector<16xf32>
    %3 = vector.multi_reduction <add>, %2, %cst_3 [1] : vector<16x1024xf32> to vector<16xf32>
    %4 = vector.shape_cast %3 : vector<16xf32> to vector<16x1xf32>
    %cst_4 = arith.constant 9.765625E-4 : f32
    %5 = vector.broadcast %cst_4 : f32 to vector<16x1xf32>
    %6 = arith.mulf %4, %5 : vector<16x1xf32>
    %7 = arith.mulf %2, %2 : vector<16x1024xf32>
    %cst_5 = arith.constant dense<0.000000e+00> : vector<16xf32>
    %8 = vector.multi_reduction <add>, %7, %cst_5 [1] : vector<16x1024xf32> to vector<16xf32>
    %9 = vector.shape_cast %8 : vector<16xf32> to vector<16x1xf32>
    %cst_6 = arith.constant 9.765625E-4 : f32
    %10 = vector.broadcast %cst_6 : f32 to vector<16x1xf32>
    %11 = arith.mulf %9, %10 : vector<16x1xf32>
    %12 = arith.mulf %6, %6 : vector<16x1xf32>
    %13 = arith.subf %11, %12 : vector<16x1xf32>
    %cst_7 = arith.constant 0.000000e+00 : f32
    %14 = vector.broadcast %cst_7 : f32 to vector<16x1xf32>
    %15 = arith.maximumf %13, %14 : vector<16x1xf32>
    %c0_8 = arith.constant 0 : index
    %c0_9 = arith.constant 0 : index
    %16 = vector.load %arg3[%c0_8, %c0_9] : memref<16x1xf32, #tpu.memory_space<vmem>>, vector<16x1xf32>
    %cst_10 = arith.constant 9.99999974E-6 : f32
    %17 = vector.broadcast %cst_10 : f32 to vector<16x1xf32>
    %18 = arith.addf %15, %17 : vector<16x1xf32>
    %19 = math.rsqrt %18 : vector<16x1xf32>
    %20 = arith.mulf %16, %19 : vector<16x1xf32>
    %c0_11 = arith.constant 0 : index
    %c0_12 = arith.constant 0 : index
    %21 = vector.load %arg4[%c0_11, %c0_12] : memref<16x1xf32, #tpu.memory_space<vmem>>, vector<16x1xf32>
    %22 = arith.mulf %6, %20 : vector<16x1xf32>
    %23 = arith.subf %21, %22 : vector<16x1xf32>
    %24 = vector.broadcast %20 : vector<16x1xf32> to vector<16x1024xf32>
    %25 = arith.mulf %2, %24 : vector<16x1024xf32>
    %26 = vector.broadcast %23 : vector<16x1xf32> to vector<16x1024xf32>
    %27 = arith.addf %25, %26 : vector<16x1024xf32>
    %cst_13 = arith.constant 0.000000e+00 : f32
    %28 = vector.broadcast %cst_13 : f32 to vector<16x1024xf32>
    %29 = arith.maximumf %27, %28 : vector<16x1024xf32>
    %c0_14 = arith.constant 0 : index
    %c0_15 = arith.constant 0 : index
    %30 = vector.load %arg5[%c0_14, %c0_15] : memref<16x1024xf32, #tpu.memory_space<vmem>>, vector<16x1024xf32>
    tpu.vector_store %arg5[%c0_14, %c0_15], %29 {strides = array<i32>} : memref<16x1024xf32, #tpu.memory_space<vmem>>, vector<16x1024xf32>,
    return
  }
  func.func @transform_0(%arg0: i32) -> (i32, i32) {
    %c0_i32 = arith.constant 0 : i32
    %c0_i32_0 = arith.constant 0 : i32
    %c0_i32_1 = arith.constant 0 : i32
    return %c0_i32, %c0_i32_0 : i32, i32
  }
  func.func @transform_1(%arg0: i32) -> (i32, i32) {
    %c0_i32 = arith.constant 0 : i32
    %c0_i32_0 = arith.constant 0 : i32
    return %c0_i32, %arg0 : i32, i32
  }
  func.func @transform_2(%arg0: i32) -> (i32, i32) {
    %c0_i32 = arith.constant 0 : i32
    %c0_i32_0 = arith.constant 0 : i32
    %c0_i32_1 = arith.constant 0 : i32
    return %c0_i32, %c0_i32_0 : i32, i32
  }
  func.func @transform_3(%arg0: i32) -> (i32, i32) {
    %c0_i32 = arith.constant 0 : i32
    %c0_i32_0 = arith.constant 0 : i32
    %c0_i32_1 = arith.constant 0 : i32
    return %c0_i32, %c0_i32_0 : i32, i32
  }
  func.func @transform_4(%arg0: i32) -> (i32, i32) {
    %c0_i32 = arith.constant 0 : i32
    %c0_i32_0 = arith.constant 0 : i32
    %c0_i32_1 = arith.constant 0 : i32
    return %c0_i32, %c0_i32_0 : i32, i32
  }
}

module attributes {stable_mosaic.version = 11 : i64} {
  func.func @_fused_layer_kernel(%arg0: i32, %arg1: memref<32x256xf32, #tpu.memory_space<vmem>>, %arg2: memref<256x256xf32, #tpu.memory_space<vmem>>, %arg3: memref<32x1xf32, #tpu.memory_space<vmem>>, %arg4: memref<32x1xf32, #tpu.memory_space<vmem>>, %arg5: memref<32x256xf32, #tpu.memory_space<vmem>>) attributes {dimension_semantics = [#tpu.dimension_semantics<arbitrary>], iteration_bounds = array<i64: 1>, scalar_prefetch = 0 : i64, scratch_operands = 0 : i64, tpu.core_type = #tpu.core_type<tc>, window_params = [{pipeline_mode = #tpu.pipeline_mode<synchronous>, transform_indices = @transform_0, window_bounds = array<i64: 32, 256>}, {transform_indices = @transform_1, window_bounds = array<i64: 256, 256>}, {pipeline_mode = #tpu.pipeline_mode<synchronous>, transform_indices = @transform_2, window_bounds = array<i64: 32, 1>}, {pipeline_mode = #tpu.pipeline_mode<synchronous>, transform_indices = @transform_3, window_bounds = array<i64: 32, 1>}, {pipeline_mode = #tpu.pipeline_mode<synchronous>, transform_indices = @transform_4, window_bounds = array<i64: 32, 256>}]} {
    %c0 = arith.constant 0 : index
    %c0_0 = arith.constant 0 : index
    %0 = vector.load %arg1[%c0, %c0_0] : memref<32x256xf32, #tpu.memory_space<vmem>>, vector<32x256xf32>
    %c0_1 = arith.constant 0 : index
    %c0_2 = arith.constant 0 : index
    %1 = vector.load %arg2[%c0_1, %c0_2] : memref<256x256xf32, #tpu.memory_space<vmem>>, vector<256x256xf32>
    %cst = arith.constant dense<0.000000e+00> : vector<32x256xf32>
    %2 = tpu.matmul %0, %1, %cst {dimension_numbers = #tpu.dot_dimension_numbers<[1], [0], [0], [1], [0, 0, 1, 1], [], []>} : vector<32x256xf32>, vector<256x256xf32>, vector<32x256xf32> -> vector<32x256xf32>
    %cst_3 = arith.constant dense<0.000000e+00> : vector<32xf32>
    %3 = vector.multi_reduction <add>, %2, %cst_3 [1] : vector<32x256xf32> to vector<32xf32>
    %4 = vector.shape_cast %3 : vector<32xf32> to vector<32x1xf32>
    %cst_4 = arith.constant 3.906250e-03 : f32
    %5 = vector.broadcast %cst_4 : f32 to vector<32x1xf32>
    %6 = arith.mulf %4, %5 : vector<32x1xf32>
    %7 = arith.mulf %2, %2 : vector<32x256xf32>
    %cst_5 = arith.constant dense<0.000000e+00> : vector<32xf32>
    %8 = vector.multi_reduction <add>, %7, %cst_5 [1] : vector<32x256xf32> to vector<32xf32>
    %9 = vector.shape_cast %8 : vector<32xf32> to vector<32x1xf32>
    %cst_6 = arith.constant 3.906250e-03 : f32
    %10 = vector.broadcast %cst_6 : f32 to vector<32x1xf32>
    %11 = arith.mulf %9, %10 : vector<32x1xf32>
    %12 = arith.mulf %6, %6 : vector<32x1xf32>
    %13 = arith.subf %11, %12 : vector<32x1xf32>
    %cst_7 = arith.constant 0.000000e+00 : f32
    %14 = vector.broadcast %cst_7 : f32 to vector<32x1xf32>
    %15 = arith.maximumf %13, %14 : vector<32x1xf32>
    %c0_8 = arith.constant 0 : index
    %c0_9 = arith.constant 0 : index
    %16 = vector.load %arg3[%c0_8, %c0_9] : memref<32x1xf32, #tpu.memory_space<vmem>>, vector<32x1xf32>
    %cst_10 = arith.constant 9.99999974E-6 : f32
    %17 = vector.broadcast %cst_10 : f32 to vector<32x1xf32>
    %18 = arith.addf %15, %17 : vector<32x1xf32>
    %19 = math.rsqrt %18 : vector<32x1xf32>
    %20 = arith.mulf %16, %19 : vector<32x1xf32>
    %c0_11 = arith.constant 0 : index
    %c0_12 = arith.constant 0 : index
    %21 = vector.load %arg4[%c0_11, %c0_12] : memref<32x1xf32, #tpu.memory_space<vmem>>, vector<32x1xf32>
    %22 = arith.mulf %6, %20 : vector<32x1xf32>
    %23 = arith.subf %21, %22 : vector<32x1xf32>
    %24 = vector.broadcast %20 : vector<32x1xf32> to vector<32x256xf32>
    %25 = arith.mulf %2, %24 : vector<32x256xf32>
    %26 = vector.broadcast %23 : vector<32x1xf32> to vector<32x256xf32>
    %27 = arith.addf %25, %26 : vector<32x256xf32>
    %cst_13 = arith.constant 0.000000e+00 : f32
    %28 = vector.broadcast %cst_13 : f32 to vector<32x256xf32>
    %29 = arith.maximumf %27, %28 : vector<32x256xf32>
    %c0_14 = arith.constant 0 : index
    %c0_15 = arith.constant 0 : index
    %30 = vector.load %arg5[%c0_14, %c0_15] : memref<32x256xf32, #tpu.memory_space<vmem>>, vector<32x256xf32>
    tpu.vector_store %arg5[%c0_14, %c0_15], %29 {strides = array<i32>} : memref<32x256xf32, #tpu.memory_space<vmem>>, vector<32x256xf32>,
    return
  }
  func.func @transform_0(%arg0: i32) -> (i32, i32) {
    %c0_i32 = arith.constant 0 : i32
    %c0_i32_0 = arith.constant 0 : i32
    %c0_i32_1 = arith.constant 0 : i32
    return %c0_i32, %c0_i32_0 : i32, i32
  }
  func.func @transform_1(%arg0: i32) -> (i32, i32) {
    %c0_i32 = arith.constant 0 : i32
    %c0_i32_0 = arith.constant 0 : i32
    return %c0_i32, %arg0 : i32, i32
  }
  func.func @transform_2(%arg0: i32) -> (i32, i32) {
    %c0_i32 = arith.constant 0 : i32
    %c0_i32_0 = arith.constant 0 : i32
    %c0_i32_1 = arith.constant 0 : i32
    return %c0_i32, %c0_i32_0 : i32, i32
  }
  func.func @transform_3(%arg0: i32) -> (i32, i32) {
    %c0_i32 = arith.constant 0 : i32
    %c0_i32_0 = arith.constant 0 : i32
    %c0_i32_1 = arith.constant 0 : i32
    return %c0_i32, %c0_i32_0 : i32, i32
  }
  func.func @transform_4(%arg0: i32) -> (i32, i32) {
    %c0_i32 = arith.constant 0 : i32
    %c0_i32_0 = arith.constant 0 : i32
    %c0_i32_1 = arith.constant 0 : i32
    return %c0_i32, %c0_i32_0 : i32, i32
  }
}

</mosaic_0001>

<llo_original>
// kernel: _lambda_.3
$region0: #{_lambda_.3}
  #allocation0 [shape = 'u32[]', space=smem, size = 0x4, offset = 0x4, fixed_abs, tag = 'smem constant byte address 0x4 - core index']
  #allocation1 [shape = 'u32[144,128]{1,0:T(1,128)}', space=vmem, size = 0x12000, scoped, tag = 'internal scratch']
  %s0 = inlined_call_operand.vmem [shape: f32[8,48], index: 0, kind: input, shape index: {}]
  %s1 = inlined_call_operand.vmem [shape: f32[48,4096], index: 1, kind: input, shape index: {}]
  %s2 = inlined_call_operand.vmem [shape: f32[8,1], index: 2, kind: input, shape index: {}]
  %s3 = inlined_call_operand.vmem [shape: f32[8,1], index: 3, kind: input, shape index: {}]
  %s4 = inlined_call_operand.vmem [shape: f32[8,4096], index: 4, kind: output, shape index: {}]
  %s5 = sld [smem:[#allocation0]]
  $region26: #{_lambda_.3} parent=0
    _
  %s7 = ssub.s32 1, %s5
  %s8 = scalar_select 0, %s7, %s5
  // Predicated region
  $region2: #{_lambda_.3} parent=0 // pred_check
    _
  $region3: #{_lambda_.3} parent=0 // pred_check_branch
    %10 = sbr.rel (0) target = $region5
  $region4: #{_lambda_.3} parent=0 // pred_region
    _
  $region5: #{_lambda_.3} parent=0 // pred_fallthru
    _
  // Predicated region
  $region6: #{_lambda_.3} parent=0 // pred_check
    _
  $region7: #{_lambda_.3} parent=0 // pred_check_branch
    %12 = sbr.rel (0) target = $region9
  $region8: #{_lambda_.3} parent=0 // pred_region
    _
  $region9: #{_lambda_.3} parent=0 // pred_fallthru
    _
  // Predicated region
  $region10: #{_lambda_.3} parent=0 // pred_check
    _
  $region11: #{_lambda_.3} parent=0 // pred_check_branch
    %14 = sbr.rel (0) target = $region13
  $region12: #{_lambda_.3} parent=0 // pred_region
    _
  $region13: #{_lambda_.3} parent=0 // pred_fallthru
    _
  // Predicated region
  $region14: #{_lambda_.3} parent=0 // pred_check
    _
  $region15: #{_lambda_.3} parent=0 // pred_check_branch
    %16 = sbr.rel (0) target = $region17
  $region16: #{_lambda_.3} parent=0 // pred_region
    _
  $region17: #{_lambda_.3} parent=0 // pred_fallthru
    _
  %v17 = vld [vmem:[%s0] sm:$0xff]
  %v18 = vld [vmem:[%s1] sm:$0xff]
  %v19 = vld [vmem:[%s1 + $0x8] sm:$0xff]
  %v20 = vld [vmem:[%s1 + $0x10] sm:$0xff]
  %v21 = vld [vmem:[%s1 + $0x18] sm:$0xff]
  %v22 = vld [vmem:[%s1 + $0x20] sm:$0xff]
  %v23 = vld [vmem:[%s1 + $0x28] sm:$0xff]
  %v24 = vld [vmem:[%s1 + $0x30] sm:$0xff]
  %v25 = vld [vmem:[%s1 + $0x38] sm:$0xff]
  %v26 = vld [vmem:[%s1 + $0x40] sm:$0xff]
  %v27 = vld [vmem:[%s1 + $0x48] sm:$0xff]
  %v28 = vld [vmem:[%s1 + $0x50] sm:$0xff]
  %v29 = vld [vmem:[%s1 + $0x58] sm:$0xff]
  %v30 = vld [vmem:[%s1 + $0x60] sm:$0xff]
  %v31 = vld [vmem:[%s1 + $0x68] sm:$0xff]
  %v32 = vld [vmem:[%s1 + $0x70] sm:$0xff]
  %v33 = vld [vmem:[%s1 + $0x78] sm:$0xff]
  %v34 = vld [vmem:[%s1 + $0x80] sm:$0xff]
  %v35 = vld [vmem:[%s1 + $0x88] sm:$0xff]
  %v36 = vld [vmem:[%s1 + $0x90] sm:$0xff]
  %v37 = vld [vmem:[%s1 + $0x98] sm:$0xff]
  %v38 = vld [vmem:[%s1 + $0xa0] sm:$0xff]
  %v39 = vld [vmem:[%s1 + $0xa8] sm:$0xff]
  %v40 = vld [vmem:[%s1 + $0xb0] sm:$0xff]
  %v41 = vld [vmem:[%s1 + $0xb8] sm:$0xff]
  %v42 = vld [vmem:[%s1 + $0xc0] sm:$0xff]
  %v43 = vld [vmem:[%s1 + $0xc8] sm:$0xff]
  %v44 = vld [vmem:[%s1 + $0xd0] sm:$0xff]
  %v45 = vld [vmem:[%s1 + $0xd8] sm:$0xff]
  %v46 = vld [vmem:[%s1 + $0xe0] sm:$0xff]
  %v47 = vld [vmem:[%s1 + $0xe8] sm:$0xff]
  %v48 = vld [vmem:[%s1 + $0xf0] sm:$0xff]
  %v49 = vld [vmem:[%s1 + $0xf8] sm:$0xff]
  %v50 = vld [vmem:[%s1 + $0x100] sm:$0xff]
  %v51 = vld [vmem:[%s1 + $0x108] sm:$0xff]
  %v52 = vld [vmem:[%s1 + $0x110] sm:$0xff]
  %v53 = vld [vmem:[%s1 + $0x118] sm:$0xff]
  %v54 = vld [vmem:[%s1 + $0x120] sm:$0xff]
  %v55 = vld [vmem:[%s1 + $0x128] sm:$0xff]
  %v56 = vld [vmem:[%s1 + $0x130] sm:$0xff]
  %v57 = vld [vmem:[%s1 + $0x138] sm:$0xff]
  %v58 = vld [vmem:[%s1 + $0x140] sm:$0xff]
  %v59 = vld [vmem:[%s1 + $0x148] sm:$0xff]
  %v60 = vld [vmem:[%s1 + $0x150] sm:$0xff]
  %v61 = vld [vmem:[%s1 + $0x158] sm:$0xff]
  %v62 = vld [vmem:[%s1 + $0x160] sm:$0xff]
  %v63 = vld [vmem:[%s1 + $0x168] sm:$0xff]
  %v64 = vld [vmem:[%s1 + $0x170] sm:$0xff]
  %v65 = vld [vmem:[%s1 + $0x178] sm:$0xff]
  %v66 = vld [vmem:[%s1 + $0x180] sm:$0xff]
  %v67 = vld [vmem:[%s1 + $0x188] sm:$0xff]
  %v68 = vld [vmem:[%s1 + $0x190] sm:$0xff]
  %v69 = vld [vmem:[%s1 + $0x198] sm:$0xff]
  %v70 = vld [vmem:[%s1 + $0x1a0] sm:$0xff]
  %v71 = vld [vmem:[%s1 + $0x1a8] sm:$0xff]
  %v72 = vld [vmem:[%s1 + $0x1b0] sm:$0xff]
  %v73 = vld [vmem:[%s1 + $0x1b8] sm:$0xff]
  %v74 = vld [vmem:[%s1 + $0x1c0] sm:$0xff]
  %v75 = vld [vmem:[%s1 + $0x1c8] sm:$0xff]
  %v76 = vld [vmem:[%s1 + $0x1d0] sm:$0xff]
  %v77 = vld [vmem:[%s1 + $0x1d8] sm:$0xff]
  %v78 = vld [vmem:[%s1 + $0x1e0] sm:$0xff]
  %v79 = vld [vmem:[%s1 + $0x1e8] sm:$0xff]
  %v80 = vld [vmem:[%s1 + $0x1f0] sm:$0xff]
  %v81 = vld [vmem:[%s1 + $0x1f8] sm:$0xff]
  %v82 = vld [vmem:[%s1 + $0x200] sm:$0xff]
  %v83 = vld [vmem:[%s1 + $0x208] sm:$0xff]
  %v84 = vld [vmem:[%s1 + $0x210] sm:$0xff]
  %v85 = vld [vmem:[%s1 + $0x218] sm:$0xff]
  %v86 = vld [vmem:[%s1 + $0x220] sm:$0xff]
  %v87 = vld [vmem:[%s1 + $0x228] sm:$0xff]
  %v88 = vld [vmem:[%s1 + $0x230] sm:$0xff]
  %v89 = vld [vmem:[%s1 + $0x238] sm:$0xff]
  %v90 = vld [vmem:[%s1 + $0x240] sm:$0xff]
  %v91 = vld [vmem:[%s1 + $0x248] sm:$0xff]
  %v92 = vld [vmem:[%s1 + $0x250] sm:$0xff]
  %v93 = vld [vmem:[%s1 + $0x258] sm:$0xff]
  %v94 = vld [vmem:[%s1 + $0x260] sm:$0xff]
  %v95 = vld [vmem:[%s1 + $0x268] sm:$0xff]
  %v96 = vld [vmem:[%s1 + $0x270] sm:$0xff]
  %v97 = vld [vmem:[%s1 + $0x278] sm:$0xff]
  %v98 = vld [vmem:[%s1 + $0x280] sm:$0xff]
  %v99 = vld [vmem:[%s1 + $0x288] sm:$0xff]
  %v100 = vld [vmem:[%s1 + $0x290] sm:$0xff]
  %v101 = vld [vmem:[%s1 + $0x298] sm:$0xff]
  %v102 = vld [vmem:[%s1 + $0x2a0] sm:$0xff]
  %v103 = vld [vmem:[%s1 + $0x2a8] sm:$0xff]
  %v104 = vld [vmem:[%s1 + $0x2b0] sm:$0xff]
  %v105 = vld [vmem:[%s1 + $0x2b8] sm:$0xff]
  %v106 = vld [vmem:[%s1 + $0x2c0] sm:$0xff]
  %v107 = vld [vmem:[%s1 + $0x2c8] sm:$0xff]
  %v108 = vld [vmem:[%s1 + $0x2d0] sm:$0xff]
  %v109 = vld [vmem:[%s1 + $0x2d8] sm:$0xff]
  %v110 = vld [vmem:[%s1 + $0x2e0] sm:$0xff]
  %v111 = vld [vmem:[%s1 + $0x2e8] sm:$0xff]
  %v112 = vld [vmem:[%s1 + $0x2f0] sm:$0xff]
  %v113 = vld [vmem:[%s1 + $0x2f8] sm:$0xff]
  %v114 = vld [vmem:[%s1 + $0x300] sm:$0xff]
  %v115 = vld [vmem:[%s1 + $0x308] sm:$0xff]
  %v116 = vld [vmem:[%s1 + $0x310] sm:$0xff]
  %v117 = vld [vmem:[%s1 + $0x318] sm:$0xff]
  %v118 = vld [vmem:[%s1 + $0x320] sm:$0xff]
  %v119 = vld [vmem:[%s1 + $0x328] sm:$0xff]
  %v120 = vld [vmem:[%s1 + $0x330] sm:$0xff]
  %v121 = vld [vmem:[%s1 + $0x338] sm:$0xff]
  %v122 = vld [vmem:[%s1 + $0x340] sm:$0xff]
  %v123 = vld [vmem:[%s1 + $0x348] sm:$0xff]
  %v124 = vld [vmem:[%s1 + $0x350] sm:$0xff]
  %v125 = vld [vmem:[%s1 + $0x358] sm:$0xff]
  %v126 = vld [vmem:[%s1 + $0x360] sm:$0xff]
  %v127 = vld [vmem:[%s1 + $0x368] sm:$0xff]
  %v128 = vld [vmem:[%s1 + $0x370] sm:$0xff]
  %v129 = vld [vmem:[%s1 + $0x378] sm:$0xff]
  %v130 = vld [vmem:[%s1 + $0x380] sm:$0xff]
  %v131 = vld [vmem:[%s1 + $0x388] sm:$0xff]
  %v132 = vld [vmem:[%s1 + $0x390] sm:$0xff]
  %v133 = vld [vmem:[%s1 + $0x398] sm:$0xff]
  %v134 = vld [vmem:[%s1 + $0x3a0] sm:$0xff]
  %v135 = vld [vmem:[%s1 + $0x3a8] sm:$0xff]
  %v136 = vld [vmem:[%s1 + $0x3b0] sm:$0xff]
  %v137 = vld [vmem:[%s1 + $0x3b8] sm:$0xff]
  %v138 = vld [vmem:[%s1 + $0x3c0] sm:$0xff]
  %v139 = vld [vmem:[%s1 + $0x3c8] sm:$0xff]
  %v140 = vld [vmem:[%s1 + $0x3d0] sm:$0xff]
  %v141 = vld [vmem:[%s1 + $0x3d8] sm:$0xff]
  %v142 = vld [vmem:[%s1 + $0x3e0] sm:$0xff]
  %v143 = vld [vmem:[%s1 + $0x3e8] sm:$0xff]
  %v144 = vld [vmem:[%s1 + $0x3f0] sm:$0xff]
  %v145 = vld [vmem:[%s1 + $0x3f8] sm:$0xff]
  %v146 = vld [vmem:[%s1 + $0x400] sm:$0xff]
  %v147 = vld [vmem:[%s1 + $0x408] sm:$0xff]
  %v148 = vld [vmem:[%s1 + $0x410] sm:$0xff]
  %v149 = vld [vmem:[%s1 + $0x418] sm:$0xff]
  %v150 = vld [vmem:[%s1 + $0x420] sm:$0xff]
  %v151 = vld [vmem:[%s1 + $0x428] sm:$0xff]
  %v152 = vld [vmem:[%s1 + $0x430] sm:$0xff]
  %v153 = vld [vmem:[%s1 + $0x438] sm:$0xff]
  %v154 = vld [vmem:[%s1 + $0x440] sm:$0xff]
  %v155 = vld [vmem:[%s1 + $0x448] sm:$0xff]
  %v156 = vld [vmem:[%s1 + $0x450] sm:$0xff]
  %v157 = vld [vmem:[%s1 + $0x458] sm:$0xff]
  %v158 = vld [vmem:[%s1 + $0x460] sm:$0xff]
  %v159 = vld [vmem:[%s1 + $0x468] sm:$0xff]
  %v160 = vld [vmem:[%s1 + $0x470] sm:$0xff]
  %v161 = vld [vmem:[%s1 + $0x478] sm:$0xff]
  %v162 = vld [vmem:[%s1 + $0x480] sm:$0xff]
  %v163 = vld [vmem:[%s1 + $0x488] sm:$0xff]
  %v164 = vld [vmem:[%s1 + $0x490] sm:$0xff]
  %v165 = vld [vmem:[%s1 + $0x498] sm:$0xff]
  %v166 = vld [vmem:[%s1 + $0x4a0] sm:$0xff]
  %v167 = vld [vmem:[%s1 + $0x4a8] sm:$0xff]
  %v168 = vld [vmem:[%s1 + $0x4b0] sm:$0xff]
  %v169 = vld [vmem:[%s1 + $0x4b8] sm:$0xff]
  %v170 = vld [vmem:[%s1 + $0x4c0] sm:$0xff]
  %v171 = vld [vmem:[%s1 + $0x4c8] sm:$0xff]
  %v172 = vld [vmem:[%s1 + $0x4d0] sm:$0xff]
  %v173 = vld [vmem:[%s1 + $0x4d8] sm:$0xff]
  %v174 = vld [vmem:[%s1 + $0x4e0] sm:$0xff]
  %v175 = vld [vmem:[%s1 + $0x4e8] sm:$0xff]
  %v176 = vld [vmem:[%s1 + $0x4f0] sm:$0xff]
  %v177 = vld [vmem:[%s1 + $0x4f8] sm:$0xff]
  %v178 = vld [vmem:[%s1 + $0x500] sm:$0xff]
  %v179 = vld [vmem:[%s1 + $0x508] sm:$0xff]
  %v180 = vld [vmem:[%s1 + $0x510] sm:$0xff]
  %v181 = vld [vmem:[%s1 + $0x518] sm:$0xff]
  %v182 = vld [vmem:[%s1 + $0x520] sm:$0xff]
  %v183 = vld [vmem:[%s1 + $0x528] sm:$0xff]
  %v184 = vld [vmem:[%s1 + $0x530] sm:$0xff]
  %v185 = vld [vmem:[%s1 + $0x538] sm:$0xff]
  %v186 = vld [vmem:[%s1 + $0x540] sm:$0xff]
  %v187 = vld [vmem:[%s1 + $0x548] sm:$0xff]
  %v188 = vld [vmem:[%s1 + $0x550] sm:$0xff]
  %v189 = vld [vmem:[%s1 + $0x558] sm:$0xff]
  %v190 = vld [vmem:[%s1 + $0x560] sm:$0xff]
  %v191 = vld [vmem:[%s1 + $0x568] sm:$0xff]
  %v192 = vld [vmem:[%s1 + $0x570] sm:$0xff]
  %v193 = vld [vmem:[%s1 + $0x578] sm:$0xff]
  %v194 = vld [vmem:[%s1 + $0x580] sm:$0xff]
  %v195 = vld [vmem:[%s1 + $0x588] sm:$0xff]
  %v196 = vld [vmem:[%s1 + $0x590] sm:$0xff]
  %v197 = vld [vmem:[%s1 + $0x598] sm:$0xff]
  %v198 = vld [vmem:[%s1 + $0x5a0] sm:$0xff]
  %v199 = vld [vmem:[%s1 + $0x5a8] sm:$0xff]
  %v200 = vld [vmem:[%s1 + $0x5b0] sm:$0xff]
  %v201 = vld [vmem:[%s1 + $0x5b8] sm:$0xff]
  %v202 = vld [vmem:[%s1 + $0x5c0] sm:$0xff]
  %v203 = vld [vmem:[%s1 + $0x5c8] sm:$0xff]
  %v204 = vld [vmem:[%s1 + $0x5d0] sm:$0xff]
  %v205 = vld [vmem:[%s1 + $0x5d8] sm:$0xff]
  %v206 = vld [vmem:[%s1 + $0x5e0] sm:$0xff]
  %v207 = vld [vmem:[%s1 + $0x5e8] sm:$0xff]
  %v208 = vld [vmem:[%s1 + $0x5f0] sm:$0xff]
  %v209 = vld [vmem:[%s1 + $0x5f8] sm:$0xff]
  %vm210 = vcmask 392192
  %v212 = vsel %vm210, %v17, 0
  %214 = vmatprep.subr.mxu0 0.0
  %215 = vmatpush1.msra.mxu0 0.0
  %216 = vmatprep.subr.mxu0 0.0
  %217 = vmatpush1.msra.mxu0 0.0
  %218 = vmatprep.subr.mxu0 0.0
  %219 = vmatpush1.msra.mxu0 0.0
  %220 = vmatprep.subr.mxu0 0.0
  %221 = vmatpush1.msra.mxu0 0.0
  %222 = vmatprep.subr.mxu0 0.0
  %223 = vmatpush1.msra.mxu0 0.0
  %224 = vmatprep.subr.mxu0 0.0
  %225 = vmatpush1.msra.mxu0 0.0
  %226 = vmatprep.subr.mxu0 0.0
  %227 = vmatpush1.msra.mxu0 0.0
  %228 = vmatprep.subr.mxu0 0.0
  %229 = vmatpush1.msra.mxu0 0.0
  %230 = vmatprep.subr.mxu0 0.0
  %231 = vmatpush1.msra.mxu0 0.0
  %232 = vmatprep.subr.mxu0 0.0
  %233 = vmatpush1.msra.mxu0 0.0
  %234 = vmatprep.subr.mxu0 %v179
  %235 = vmatpush1.msra.mxu0 %v178
  %236 = vmatprep.subr.mxu0 %v147
  %237 = vmatpush1.msra.mxu0 %v146
  %238 = vmatprep.subr.mxu0 %v115
  %239 = vmatpush1.msra.mxu0 %v114
  %240 = vmatprep.subr.mxu0 %v83
  %241 = vmatpush1.msra.mxu0 %v82
  %242 = vmatprep.subr.mxu0 %v51
  %243 = vmatpush1.msra.mxu0 %v50
  %244 = vmatprep.subr.mxu0 %v19
  %245 = vmatpush1.msra.mxu0 %v18
  %246 = vmatprep.subr.mxu0 0.0
  %247 = vmatpush2.msra.mxu0 0.0
  %248 = vmatprep.subr.mxu0 0.0
  %249 = vmatpush2.msra.mxu0 0.0
  %250 = vmatprep.subr.mxu0 0.0
  %251 = vmatpush2.msra.mxu0 0.0
  %252 = vmatprep.subr.mxu0 0.0
  %253 = vmatpush2.msra.mxu0 0.0
  %254 = vmatprep.subr.mxu0 0.0
  %255 = vmatpush2.msra.mxu0 0.0
  %256 = vmatprep.subr.mxu0 0.0
  %257 = vmatpush2.msra.mxu0 0.0
  %258 = vmatprep.subr.mxu0 0.0
  %259 = vmatpush2.msra.mxu0 0.0
  %260 = vmatprep.subr.mxu0 0.0
  %261 = vmatpush2.msra.mxu0 0.0
  %262 = vmatprep.subr.mxu0 0.0
  %263 = vmatpush2.msra.mxu0 0.0
  %264 = vmatprep.subr.mxu0 0.0
  %265 = vmatpush2.msra.mxu0 0.0
  %266 = vmatprep.subr.mxu0 0.0
  %267 = vmatpush2.msra.mxu0 0.0
  %268 = vmatprep.subr.mxu0 0.0
  %269 = vmatpush2.msra.mxu0 0.0
  %270 = vmatprep.subr.mxu0 0.0
  %271 = vmatpush2.msra.mxu0 0.0
  %272 = vmatprep.subr.mxu0 0.0
  %273 = vmatpush2.msra.mxu0 0.0
  %274 = vmatprep.subr.mxu0 0.0
  %275 = vmatpush2.msra.mxu0 0.0
  %276 = vmatprep.subr.mxu0 0.0
  %277 = vmatpush2.msra.mxu0 0.0
  %278 = vmatprep.mubr.f32.mxu0 0.0
  %279 = vmatmul.mubr.f32.gmra.mxu0 %v212
  %v280 = vpop.f32.mrf.mxu0
  %v281 = vadd.f32 0.0, %v280
  %v282 = vpop.f32.mrf.mxu0
  %v283 = vadd.f32 0.0, %v282
  %284 = vdwg.mxu0
  %285 = vmatprep.subr.mxu0 0.0
  %286 = vmatpush1.msra.mxu0 0.0
  %287 = vmatprep.subr.mxu0 0.0
  %288 = vmatpush1.msra.mxu0 0.0
  %289 = vmatprep.subr.mxu0 0.0
  %290 = vmatpush1.msra.mxu0 0.0
  %291 = vmatprep.subr.mxu0 0.0
  %292 = vmatpush1.msra.mxu0 0.0
  %293 = vmatprep.subr.mxu0 0.0
  %294 = vmatpush1.msra.mxu0 0.0
  %295 = vmatprep.subr.mxu0 0.0
  %296 = vmatpush1.msra.mxu0 0.0
  %297 = vmatprep.subr.mxu0 0.0
  %298 = vmatpush1.msra.mxu0 0.0
  %299 = vmatprep.subr.mxu0 0.0
  %300 = vmatpush1.msra.mxu0 0.0
  %301 = vmatprep.subr.mxu0 0.0
  %302 = vmatpush1.msra.mxu0 0.0
  %303 = vmatprep.subr.mxu0 0.0
  %304 = vmatpush1.msra.mxu0 0.0
  %305 = vmatprep.subr.mxu0 %v181
  %306 = vmatpush1.msra.mxu0 %v180
  %307 = vmatprep.subr.mxu0 %v149
  %308 = vmatpush1.msra.mxu0 %v148
  %309 = vmatprep.subr.mxu0 %v117
  %310 = vmatpush1.msra.mxu0 %v116
  %311 = vmatprep.subr.mxu0 %v85
  %312 = vmatpush1.msra.mxu0 %v84
  %313 = vmatprep.subr.mxu0 %v53
  %314 = vmatpush1.msra.mxu0 %v52
  %315 = vmatprep.subr.mxu0 %v21
  %316 = vmatpush1.msra.mxu0 %v20
  %317 = vmatprep.subr.mxu0 0.0
  %318 = vmatpush2.msra.mxu0 0.0
  %319 = vmatprep.subr.mxu0 0.0
  %320 = vmatpush2.msra.mxu0 0.0
  %321 = vmatprep.subr.mxu0 0.0
  %322 = vmatpush2.msra.mxu0 0.0
  %323 = vmatprep.subr.mxu0 0.0
  %324 = vmatpush2.msra.mxu0 0.0
  %325 = vmatprep.subr.mxu0 0.0
  %326 = vmatpush2.msra.mxu0 0.0
  %327 = vmatprep.subr.mxu0 0.0
  %328 = vmatpush2.msra.mxu0 0.0
  %329 = vmatprep.subr.mxu0 0.0
  %330 = vmatpush2.msra.mxu0 0.0
  %331 = vmatprep.subr.mxu0 0.0
  %332 = vmatpush2.msra.mxu0 0.0
  %333 = vmatprep.subr.mxu0 0.0
  %334 = vmatpush2.msra.mxu0 0.0
  %335 = vmatprep.subr.mxu0 0.0
  %336 = vmatpush2.msra.mxu0 0.0
  %337 = vmatprep.subr.mxu0 0.0
  %338 = vmatpush2.msra.mxu0 0.0
  %339 = vmatprep.subr.mxu0 0.0
  %340 = vmatpush2.msra.mxu0 0.0
  %341 = vmatprep.subr.mxu0 0.0
  %342 = vmatpush2.msra.mxu0 0.0
  %343 = vmatprep.subr.mxu0 0.0
  %344 = vmatpush2.msra.mxu0 0.0
  %345 = vmatprep.subr.mxu0 0.0
  %346 = vmatpush2.msra.mxu0 0.0
  %347 = vmatprep.subr.mxu0 0.0
  %348 = vmatpush2.msra.mxu0 0.0
  %349 = vmatprep.mubr.f32.mxu0 0.0
  %350 = vmatmul.mubr.f32.gmra.mxu0 %v212
  %v351 = vpop.f32.mrf.mxu0
  %v352 = vadd.f32 0.0, %v351
  %v353 = vpop.f32.mrf.mxu0
  %v354 = vadd.f32 0.0, %v353
  %355 = vdwg.mxu0
  %356 = vmatprep.subr.mxu0 0.0
  %357 = vmatpush1.msra.mxu0 0.0
  %358 = vmatprep.subr.mxu0 0.0
  %359 = vmatpush1.msra.mxu0 0.0
  %360 = vmatprep.subr.mxu0 0.0
  %361 = vmatpush1.msra.mxu0 0.0
  %362 = vmatprep.subr.mxu0 0.0
  %363 = vmatpush1.msra.mxu0 0.0
  %364 = vmatprep.subr.mxu0 0.0
  %365 = vmatpush1.msra.mxu0 0.0
  %366 = vmatprep.subr.mxu0 0.0
  %367 = vmatpush1.msra.mxu0 0.0
  %368 = vmatprep.subr.mxu0 0.0
  %369 = vmatpush1.msra.mxu0 0.0
  %370 = vmatprep.subr.mxu0 0.0
  %371 = vmatpush1.msra.mxu0 0.0
  %372 = vmatprep.subr.mxu0 0.0
  %373 = vmatpush1.msra.mxu0 0.0
  %374 = vmatprep.subr.mxu0 0.0
  %375 = vmatpush1.msra.mxu0 0.0
  %376 = vmatprep.subr.mxu0 %v183
  %377 = vmatpush1.msra.mxu0 %v182
  %378 = vmatprep.subr.mxu0 %v151
  %379 = vmatpush1.msra.mxu0 %v150
  %380 = vmatprep.subr.mxu0 %v119
  %381 = vmatpush1.msra.mxu0 %v118
  %382 = vmatprep.subr.mxu0 %v87
  %383 = vmatpush1.msra.mxu0 %v86
  %384 = vmatprep.subr.mxu0 %v55
  %385 = vmatpush1.msra.mxu0 %v54
  %386 = vmatprep.subr.mxu0 %v23
  %387 = vmatpush1.msra.mxu0 %v22
  %388 = vmatprep.subr.mxu0 0.0
  %389 = vmatpush2.msra.mxu0 0.0
  %390 = vmatprep.subr.mxu0 0.0
  %391 = vmatpush2.msra.mxu0 0.0
  %392 = vmatprep.subr.mxu0 0.0
  %393 = vmatpush2.msra.mxu0 0.0
  %394 = vmatprep.subr.mxu0 0.0
  %395 = vmatpush2.msra.mxu0 0.0
  %396 = vmatprep.subr.mxu0 0.0
  %397 = vmatpush2.msra.mxu0 0.0
  %398 = vmatprep.subr.mxu0 0.0
  %399 = vmatpush2.msra.mxu0 0.0
  %400 = vmatprep.subr.mxu0 0.0
  %401 = vmatpush2.msra.mxu0 0.0
  %402 = vmatprep.subr.mxu0 0.0
  %403 = vmatpush2.msra.mxu0 0.0
  %404 = vmatprep.subr.mxu0 0.0
  %405 = vmatpush2.msra.mxu0 0.0
  %406 = vmatprep.subr.mxu0 0.0
  %407 = vmatpush2.msra.mxu0 0.0
  %408 = vmatprep.subr.mxu0 0.0
  %409 = vmatpush2.msra.mxu0 0.0
  %410 = vmatprep.subr.mxu0 0.0
  %411 = vmatpush2.msra.mxu0 0.0
  %412 = vmatprep.subr.mxu0 0.0
  %413 = vmatpush2.msra.mxu0 0.0
  %414 = vmatprep.subr.mxu0 0.0
  %415 = vmatpush2.msra.mxu0 0.0
  %416 = vmatprep.subr.mxu0 0.0
  %417 = vmatpush2.msra.mxu0 0.0
  %418 = vmatprep.subr.mxu0 0.0
  %419 = vmatpush2.msra.mxu0 0.0
  %420 = vmatprep.mubr.f32.mxu0 0.0
  %421 = vmatmul.mubr.f32.gmra.mxu0 %v212
  %v422 = vpop.f32.mrf.mxu0
  %v423 = vadd.f32 0.0, %v422
  %v424 = vpop.f32.mrf.mxu0
  %v425 = vadd.f32 0.0, %v424
  %426 = vdwg.mxu0
  %427 = vmatprep.subr.mxu0 0.0
  %428 = vmatpush1.msra.mxu0 0.0
  %429 = vmatprep.subr.mxu0 0.0
  %430 = vmatpush1.msra.mxu0 0.0
  %431 = vmatprep.subr.mxu0 0.0
  %432 = vmatpush1.msra.mxu0 0.0
  %433 = vmatprep.subr.mxu0 0.0
  %434 = vmatpush1.msra.mxu0 0.0
  %435 = vmatprep.subr.mxu0 0.0
  %436 = vmatpush1.msra.mxu0 0.0
  %437 = vmatprep.subr.mxu0 0.0
  %438 = vmatpush1.msra.mxu0 0.0
  %439 = vmatprep.subr.mxu0 0.0
  %440 = vmatpush1.msra.mxu0 0.0
  %441 = vmatprep.subr.mxu0 0.0
  %442 = vmatpush1.msra.mxu0 0.0
  %443 = vmatprep.subr.mxu0 0.0
  %444 = vmatpush1.msra.mxu0 0.0
  %445 = vmatprep.subr.mxu0 0.0
  %446 = vmatpush1.msra.mxu0 0.0
  %447 = vmatprep.subr.mxu0 %v185
  %448 = vmatpush1.msra.mxu0 %v184
  %449 = vmatprep.subr.mxu0 %v153
  %450 = vmatpush1.msra.mxu0 %v152
  %451 = vmatprep.subr.mxu0 %v121
  %452 = vmatpush1.msra.mxu0 %v120
  %453 = vmatprep.subr.mxu0 %v89
  %454 = vmatpush1.msra.mxu0 %v88
  %455 = vmatprep.subr.mxu0 %v57
  %456 = vmatpush1.msra.mxu0 %v56
  %457 = vmatprep.subr.mxu0 %v25
  %458 = vmatpush1.msra.mxu0 %v24
  %459 = vmatprep.subr.mxu0 0.0
  %460 = vmatpush2.msra.mxu0 0.0
  %461 = vmatprep.subr.mxu0 0.0
  %462 = vmatpush2.msra.mxu0 0.0
  %463 = vmatprep.subr.mxu0 0.0
  %464 = vmatpush2.msra.mxu0 0.0
  %465 = vmatprep.subr.mxu0 0.0
  %466 = vmatpush2.msra.mxu0 0.0
  %467 = vmatprep.subr.mxu0 0.0
  %468 = vmatpush2.msra.mxu0 0.0
  %469 = vmatprep.subr.mxu0 0.0
  %470 = vmatpush2.msra.mxu0 0.0
  %471 = vmatprep.subr.mxu0 0.0
  %472 = vmatpush2.msra.mxu0 0.0
  %473 = vmatprep.subr.mxu0 0.0
  %474 = vmatpush2.msra.mxu0 0.0
  %475 = vmatprep.subr.mxu0 0.0
  %476 = vmatpush2.msra.mxu0 0.0
  %477 = vmatprep.subr.mxu0 0.0
  %478 = vmatpush2.msra.mxu0 0.0
  %479 = vmatprep.subr.mxu0 0.0
  %480 = vmatpush2.msra.mxu0 0.0
  %481 = vmatprep.subr.mxu0 0.0
  %482 = vmatpush2.msra.mxu0 0.0
  %483 = vmatprep.subr.mxu0 0.0
  %484 = vmatpush2.msra.mxu0 0.0
  %485 = vmatprep.subr.mxu0 0.0
  %486 = vmatpush2.msra.mxu0 0.0
  %487 = vmatprep.subr.mxu0 0.0
  %488 = vmatpush2.msra.mxu0 0.0
  %489 = vmatprep.subr.mxu0 0.0
  %490 = vmatpush2.msra.mxu0 0.0
  %491 = vmatprep.mubr.f32.mxu0 0.0
  %492 = vmatmul.mubr.f32.gmra.mxu0 %v212
  %v493 = vpop.f32.mrf.mxu0
  %v494 = vadd.f32 0.0, %v493
  %v495 = vpop.f32.mrf.mxu0
  %v496 = vadd.f32 0.0, %v495
  %497 = vdwg.mxu0
  %498 = vmatprep.subr.mxu0 0.0
  %499 = vmatpush1.msra.mxu0 0.0
  %500 = vmatprep.subr.mxu0 0.0
  %501 = vmatpush1.msra.mxu0 0.0
  %502 = vmatprep.subr.mxu0 0.0
  %503 = vmatpush1.msra.mxu0 0.0
  %504 = vmatprep.subr.mxu0 0.0
  %505 = vmatpush1.msra.mxu0 0.0
  %506 = vmatprep.subr.mxu0 0.0
  %507 = vmatpush1.msra.mxu0 0.0
  %508 = vmatprep.subr.mxu0 0.0
  %509 = vmatpush1.msra.mxu0 0.0
  %510 = vmatprep.subr.mxu0 0.0
  %511 = vmatpush1.msra.mxu0 0.0
  %512 = vmatprep.subr.mxu0 0.0
  %513 = vmatpush1.msra.mxu0 0.0
  %514 = vmatprep.subr.mxu0 0.0
  %515 = vmatpush1.msra.mxu0 0.0
  %516 = vmatprep.subr.mxu0 0.0
  %517 = vmatpush1.msra.mxu0 0.0
  %518 = vmatprep.subr.mxu0 %v187
  %519 = vmatpush1.msra.mxu0 %v186
  %520 = vmatprep.subr.mxu0 %v155
  %521 = vmatpush1.msra.mxu0 %v154
  %522 = vmatprep.subr.mxu0 %v123
  %523 = vmatpush1.msra.mxu0 %v122
  %524 = vmatprep.subr.mxu0 %v91
  %525 = vmatpush1.msra.mxu0 %v90
  %526 = vmatprep.subr.mxu0 %v59
  %527 = vmatpush1.msra.mxu0 %v58
  %528 = vmatprep.subr.mxu0 %v27
  %529 = vmatpush1.msra.mxu0 %v26
  %530 = vmatprep.subr.mxu0 0.0
  %531 = vmatpush2.msra.mxu0 0.0
  %532 = vmatprep.subr.mxu0 0.0
  %533 = vmatpush2.msra.mxu0 0.0
  %534 = vmatprep.subr.mxu0 0.0
  %535 = vmatpush2.msra.mxu0 0.0
  %536 = vmatprep.subr.mxu0 0.0
  %537 = vmatpush2.msra.mxu0 0.0
  %538 = vmatprep.subr.mxu0 0.0
  %539 = vmatpush2.msra.mxu0 0.0
  %540 = vmatprep.subr.mxu0 0.0
  %541 = vmatpush2.msra.mxu0 0.0
  %542 = vmatprep.subr.mxu0 0.0
  %543 = vmatpush2.msra.mxu0 0.0
  %544 = vmatprep.subr.mxu0 0.0
  %545 = vmatpush2.msra.mxu0 0.0
  %546 = vmatprep.subr.mxu0 0.0
  %547 = vmatpush2.msra.mxu0 0.0
  %548 = vmatprep.subr.mxu0 0.0
  %549 = vmatpush2.msra.mxu0 0.0
  %550 = vmatprep.subr.mxu0 0.0
  %551 = vmatpush2.msra.mxu0 0.0
  %552 = vmatprep.subr.mxu0 0.0
  %553 = vmatpush2.msra.mxu0 0.0
  %554 = vmatprep.subr.mxu0 0.0
  %555 = vmatpush2.msra.mxu0 0.0
  %556 = vmatprep.subr.mxu0 0.0
  %557 = vmatpush2.msra.mxu0 0.0
  %558 = vmatprep.subr.mxu0 0.0
  %559 = vmatpush2.msra.mxu0 0.0
  %560 = vmatprep.subr.mxu0 0.0
  %561 = vmatpush2.msra.mxu0 0.0
  %562 = vmatprep.mubr.f32.mxu0 0.0
  %563 = vmatmul.mubr.f32.gmra.mxu0 %v212
  %v564 = vpop.f32.mrf.mxu0
  %v565 = vadd.f32 0.0, %v564
  %v566 = vpop.f32.mrf.mxu0
  %v567 = vadd.f32 0.0, %v566
  %568 = vdwg.mxu0
  %569 = vmatprep.subr.mxu0 0.0
  %570 = vmatpush1.msra.mxu0 0.0
  %571 = vmatprep.subr.mxu0 0.0
  %572 = vmatpush1.msra.mxu0 0.0
  %573 = vmatprep.subr.mxu0 0.0
  %574 = vmatpush1.msra.mxu0 0.0
  %575 = vmatprep.subr.mxu0 0.0
  %576 = vmatpush1.msra.mxu0 0.0
  %577 = vmatprep.subr.mxu0 0.0
  %578 = vmatpush1.msra.mxu0 0.0
  %579 = vmatprep.subr.mxu0 0.0
  %580 = vmatpush1.msra.mxu0 0.0
  %581 = vmatprep.subr.mxu0 0.0
  %582 = vmatpush1.msra.mxu0 0.0
  %583 = vmatprep.subr.mxu0 0.0
  %584 = vmatpush1.msra.mxu0 0.0
  %585 = vmatprep.subr.mxu0 0.0
  %586 = vmatpush1.msra.mxu0 0.0
  %587 = vmatprep.subr.mxu0 0.0
  %588 = vmatpush1.msra.mxu0 0.0
  %589 = vmatprep.subr.mxu0 %v189
  %590 = vmatpush1.msra.mxu0 %v188
  %591 = vmatprep.subr.mxu0 %v157
  %592 = vmatpush1.msra.mxu0 %v156
  %593 = vmatprep.subr.mxu0 %v125
  %594 = vmatpush1.msra.mxu0 %v124
  %595 = vmatprep.subr.mxu0 %v93
  %596 = vmatpush1.msra.mxu0 %v92
  %597 = vmatprep.subr.mxu0 %v61
  %598 = vmatpush1.msra.mxu0 %v60
  %599 = vmatprep.subr.mxu0 %v29
  %600 = vmatpush1.msra.mxu0 %v28
  %601 = vmatprep.subr.mxu0 0.0
  %602 = vmatpush2.msra.mxu0 0.0
  %603 = vmatprep.subr.mxu0 0.0
  %604 = vmatpush2.msra.mxu0 0.0
  %605 = vmatprep.subr.mxu0 0.0
  %606 = vmatpush2.msra.mxu0 0.0
  %607 = vmatprep.subr.mxu0 0.0
  %608 = vmatpush2.msra.mxu0 0.0
  %609 = vmatprep.subr.mxu0 0.0
  %610 = vmatpush2.msra.mxu0 0.0
  %611 = vmatprep.subr.mxu0 0.0
  %612 = vmatpush2.msra.mxu0 0.0
  %613 = vmatprep.subr.mxu0 0.0
  %614 = vmatpush2.msra.mxu0 0.0
  %615 = vmatprep.subr.mxu0 0.0
  %616 = vmatpush2.msra.mxu0 0.0
  %617 = vmatprep.subr.mxu0 0.0
  %618 = vmatpush2.msra.mxu0 0.0
  %619 = vmatprep.subr.mxu0 0.0
  %620 = vmatpush2.msra.mxu0 0.0
  %621 = vmatprep.subr.mxu0 0.0
  %622 = vmatpush2.msra.mxu0 0.0
  %623 = vmatprep.subr.mxu0 0.0
  %624 = vmatpush2.msra.mxu0 0.0
  %625 = vmatprep.subr.mxu0 0.0
  %626 = vmatpush2.msra.mxu0 0.0
  %627 = vmatprep.subr.mxu0 0.0
  %628 = vmatpush2.msra.mxu0 0.0
  %629 = vmatprep.subr.mxu0 0.0
  %630 = vmatpush2.msra.mxu0 0.0
  %631 = vmatprep.subr.mxu0 0.0
  %632 = vmatpush2.msra.mxu0 0.0
  %633 = vmatprep.mubr.f32.mxu0 0.0
  %634 = vmatmul.mubr.f32.gmra.mxu0 %v212
  %v635 = vpop.f32.mrf.mxu0
  %v636 = vadd.f32 0.0, %v635
  %v637 = vpop.f32.mrf.mxu0
  %v638 = vadd.f32 0.0, %v637
  %639 = vdwg.mxu0
  %640 = vmatprep.subr.mxu0 0.0
  %641 = vmatpush1.msra.mxu0 0.0
  %642 = vmatprep.subr.mxu0 0.0
  %643 = vmatpush1.msra.mxu0 0.0
  %644 = vmatprep.subr.mxu0 0.0
  %645 = vmatpush1.msra.mxu0 0.0
  %646 = vmatprep.subr.mxu0 0.0
  %647 = vmatpush1.msra.mxu0 0.0
  %648 = vmatprep.subr.mxu0 0.0
  %649 = vmatpush1.msra.mxu0 0.0
  %650 = vmatprep.subr.mxu0 0.0
  %651 = vmatpush1.msra.mxu0 0.0
  %652 = vmatprep.subr.mxu0 0.0
  %653 = vmatpush1.msra.mxu0 0.0
  %654 = vmatprep.subr.mxu0 0.0
  %655 = vmatpush1.msra.mxu0 0.0
  %656 = vmatprep.subr.mxu0 0.0
  %657 = vmatpush1.msra.mxu0 0.0
  %658 = vmatprep.subr.mxu0 0.0
  %659 = vmatpush1.msra.mxu0 0.0
  %660 = vmatprep.subr.mxu0 %v191
  %661 = vmatpush1.msra.mxu0 %v190
  %662 = vmatprep.subr.mxu0 %v159
  %663 = vmatpush1.msra.mxu0 %v158
  %664 = vmatprep.subr.mxu0 %v127
  %665 = vmatpush1.msra.mxu0 %v126
  %666 = vmatprep.subr.mxu0 %v95
  %667 = vmatpush1.msra.mxu0 %v94
  %668 = vmatprep.subr.mxu0 %v63
  %669 = vmatpush1.msra.mxu0 %v62
  %670 = vmatprep.subr.mxu0 %v31
  %671 = vmatpush1.msra.mxu0 %v30
  %672 = vmatprep.subr.mxu0 0.0
  %673 = vmatpush2.msra.mxu0 0.0
  %674 = vmatprep.subr.mxu0 0.0
  %675 = vmatpush2.msra.mxu0 0.0
  %676 = vmatprep.subr.mxu0 0.0
  %677 = vmatpush2.msra.mxu0 0.0
  %678 = vmatprep.subr.mxu0 0.0
  %679 = vmatpush2.msra.mxu0 0.0
  %680 = vmatprep.subr.mxu0 0.0
  %681 = vmatpush2.msra.mxu0 0.0
  %682 = vmatprep.subr.mxu0 0.0
  %683 = vmatpush2.msra.mxu0 0.0
  %684 = vmatprep.subr.mxu0 0.0
  %685 = vmatpush2.msra.mxu0 0.0
  %686 = vmatprep.subr.mxu0 0.0
  %687 = vmatpush2.msra.mxu0 0.0
  %688 = vmatprep.subr.mxu0 0.0
  %689 = vmatpush2.msra.mxu0 0.0
  %690 = vmatprep.subr.mxu0 0.0
  %691 = vmatpush2.msra.mxu0 0.0
  %692 = vmatprep.subr.mxu0 0.0
  %693 = vmatpush2.msra.mxu0 0.0
  %694 = vmatprep.subr.mxu0 0.0
  %695 = vmatpush2.msra.mxu0 0.0
  %696 = vmatprep.subr.mxu0 0.0
  %697 = vmatpush2.msra.mxu0 0.0
  %698 = vmatprep.subr.mxu0 0.0
  %699 = vmatpush2.msra.mxu0 0.0
  %700 = vmatprep.subr.mxu0 0.0
  %701 = vmatpush2.msra.mxu0 0.0
  %702 = vmatprep.subr.mxu0 0.0
  %703 = vmatpush2.msra.mxu0 0.0
  %704 = vmatprep.mubr.f32.mxu0 0.0
  %705 = vmatmul.mubr.f32.gmra.mxu0 %v212
  %v706 = vpop.f32.mrf.mxu0
  %v707 = vadd.f32 0.0, %v706
  %v708 = vpop.f32.mrf.mxu0
  %v709 = vadd.f32 0.0, %v708
  %710 = vdwg.mxu0
  %711 = vmatprep.subr.mxu0 0.0
  %712 = vmatpush1.msra.mxu0 0.0
  %713 = vmatprep.subr.mxu0 0.0
  %714 = vmatpush1.msra.mxu0 0.0
  %715 = vmatprep.subr.mxu0 0.0
  %716 = vmatpush1.msra.mxu0 0.0
  %717 = vmatprep.subr.mxu0 0.0
  %718 = vmatpush1.msra.mxu0 0.0
  %719 = vmatprep.subr.mxu0 0.0
  %720 = vmatpush1.msra.mxu0 0.0
  %721 = vmatprep.subr.mxu0 0.0
  %722 = vmatpush1.msra.mxu0 0.0
  %723 = vmatprep.subr.mxu0 0.0
  %724 = vmatpush1.msra.mxu0 0.0
  %725 = vmatprep.subr.mxu0 0.0
  %726 = vmatpush1.msra.mxu0 0.0
  %727 = vmatprep.subr.mxu0 0.0
  %728 = vmatpush1.msra.mxu0 0.0
  %729 = vmatprep.subr.mxu0 0.0
  %730 = vmatpush1.msra.mxu0 0.0
  %731 = vmatprep.subr.mxu0 %v193
  %732 = vmatpush1.msra.mxu0 %v192
  %733 = vmatprep.subr.mxu0 %v161
  %734 = vmatpush1.msra.mxu0 %v160
  %735 = vmatprep.subr.mxu0 %v129
  %736 = vmatpush1.msra.mxu0 %v128
  %737 = vmatprep.subr.mxu0 %v97
  %738 = vmatpush1.msra.mxu0 %v96
  %739 = vmatprep.subr.mxu0 %v65
  %740 = vmatpush1.msra.mxu0 %v64
  %741 = vmatprep.subr.mxu0 %v33
  %742 = vmatpush1.msra.mxu0 %v32
  %743 = vmatprep.subr.mxu0 0.0
  %744 = vmatpush2.msra.mxu0 0.0
  %745 = vmatprep.subr.mxu0 0.0
  %746 = vmatpush2.msra.mxu0 0.0
  %747 = vmatprep.subr.mxu0 0.0
  %748 = vmatpush2.msra.mxu0 0.0
  %749 = vmatprep.subr.mxu0 0.0
  %750 = vmatpush2.msra.mxu0 0.0
  %751 = vmatprep.subr.mxu0 0.0
  %752 = vmatpush2.msra.mxu0 0.0
  %753 = vmatprep.subr.mxu0 0.0
  %754 = vmatpush2.msra.mxu0 0.0
  %755 = vmatprep.subr.mxu0 0.0
  %756 = vmatpush2.msra.mxu0 0.0
  %757 = vmatprep.subr.mxu0 0.0
  %758 = vmatpush2.msra.mxu0 0.0
  %759 = vmatprep.subr.mxu0 0.0
  %760 = vmatpush2.msra.mxu0 0.0
  %761 = vmatprep.subr.mxu0 0.0
  %762 = vmatpush2.msra.mxu0 0.0
  %763 = vmatprep.subr.mxu0 0.0
  %764 = vmatpush2.msra.mxu0 0.0
  %765 = vmatprep.subr.mxu0 0.0
  %766 = vmatpush2.msra.mxu0 0.0
  %767 = vmatprep.subr.mxu0 0.0
  %768 = vmatpush2.msra.mxu0 0.0
  %769 = vmatprep.subr.mxu0 0.0
  %770 = vmatpush2.msra.mxu0 0.0
  %771 = vmatprep.subr.mxu0 0.0
  %772 = vmatpush2.msra.mxu0 0.0
  %773 = vmatprep.subr.mxu0 0.0
  %774 = vmatpush2.msra.mxu0 0.0
  %775 = vmatprep.mubr.f32.mxu0 0.0
  %776 = vmatmul.mubr.f32.gmra.mxu0 %v212
  %v777 = vpop.f32.mrf.mxu0
  %v778 = vadd.f32 0.0, %v777
  %v779 = vpop.f32.mrf.mxu0
  %v780 = vadd.f32 0.0, %v779
  %781 = vdwg.mxu0
  %782 = vmatprep.subr.mxu0 0.0
  %783 = vmatpush1.msra.mxu0 0.0
  %784 = vmatprep.subr.mxu0 0.0
  %785 = vmatpush1.msra.mxu0 0.0
  %786 = vmatprep.subr.mxu0 0.0
  %787 = vmatpush1.msra.mxu0 0.0
  %788 = vmatprep.subr.mxu0 0.0
  %789 = vmatpush1.msra.mxu0 0.0
  %790 = vmatprep.subr.mxu0 0.0
  %791 = vmatpush1.msra.mxu0 0.0
  %792 = vmatprep.subr.mxu0 0.0
  %793 = vmatpush1.msra.mxu0 0.0
  %794 = vmatprep.subr.mxu0 0.0
  %795 = vmatpush1.msra.mxu0 0.0
  %796 = vmatprep.subr.mxu0 0.0
  %797 = vmatpush1.msra.mxu0 0.0
  %798 = vmatprep.subr.mxu0 0.0
  %799 = vmatpush1.msra.mxu0 0.0
  %800 = vmatprep.subr.mxu0 0.0
  %801 = vmatpush1.msra.mxu0 0.0
  %802 = vmatprep.subr.mxu0 %v195
  %803 = vmatpush1.msra.mxu0 %v194
  %804 = vmatprep.subr.mxu0 %v163
  %805 = vmatpush1.msra.mxu0 %v162
  %806 = vmatprep.subr.mxu0 %v131
  %807 = vmatpush1.msra.mxu0 %v130
  %808 = vmatprep.subr.mxu0 %v99
  %809 = vmatpush1.msra.mxu0 %v98
  %810 = vmatprep.subr.mxu0 %v67
  %811 = vmatpush1.msra.mxu0 %v66
  %812 = vmatprep.subr.mxu0 %v35
  %813 = vmatpush1.msra.mxu0 %v34
  %814 = vmatprep.subr.mxu0 0.0
  %815 = vmatpush2.msra.mxu0 0.0
  %816 = vmatprep.subr.mxu0 0.0
  %817 = vmatpush2.msra.mxu0 0.0
  %818 = vmatprep.subr.mxu0 0.0
  %819 = vmatpush2.msra.mxu0 0.0
  %820 = vmatprep.subr.mxu0 0.0
  %821 = vmatpush2.msra.mxu0 0.0
  %822 = vmatprep.subr.mxu0 0.0
  %823 = vmatpush2.msra.mxu0 0.0
  %824 = vmatprep.subr.mxu0 0.0
  %825 = vmatpush2.msra.mxu0 0.0
  %826 = vmatprep.subr.mxu0 0.0
  %827 = vmatpush2.msra.mxu0 0.0
  %828 = vmatprep.subr.mxu0 0.0
  %829 = vmatpush2.msra.mxu0 0.0
  %830 = vmatprep.subr.mxu0 0.0
  %831 = vmatpush2.msra.mxu0 0.0
  %832 = vmatprep.subr.mxu0 0.0
  %833 = vmatpush2.msra.mxu0 0.0
  %834 = vmatprep.subr.mxu0 0.0
  %835 = vmatpush2.msra.mxu0 0.0
  %836 = vmatprep.subr.mxu0 0.0
  %837 = vmatpush2.msra.mxu0 0.0
  %838 = vmatprep.subr.mxu0 0.0
  %839 = vmatpush2.msra.mxu0 0.0
  %840 = vmatprep.subr.mxu0 0.0
  %841 = vmatpush2.msra.mxu0 0.0
  %842 = vmatprep.subr.mxu0 0.0
  %843 = vmatpush2.msra.mxu0 0.0
  %844 = vmatprep.subr.mxu0 0.0
  %845 = vmatpush2.msra.mxu0 0.0
  %846 = vmatprep.mubr.f32.mxu0 0.0
  %847 = vmatmul.mubr.f32.gmra.mxu0 %v212
  %v848 = vpop.f32.mrf.mxu0
  %v849 = vadd.f32 0.0, %v848
  %v850 = vpop.f32.mrf.mxu0
  %v851 = vadd.f32 0.0, %v850
  %852 = vdwg.mxu0
  %853 = vmatprep.subr.mxu0 0.0
  %854 = vmatpush1.msra.mxu0 0.0
  %855 = vmatprep.subr.mxu0 0.0
  %856 = vmatpush1.msra.mxu0 0.0
  %857 = vmatprep.subr.mxu0 0.0
  %858 = vmatpush1.msra.mxu0 0.0
  %859 = vmatprep.subr.mxu0 0.0
  %860 = vmatpush1.msra.mxu0 0.0
  %861 = vmatprep.subr.mxu0 0.0
  %862 = vmatpush1.msra.mxu0 0.0
  %863 = vmatprep.subr.mxu0 0.0
  %864 = vmatpush1.msra.mxu0 0.0
  %865 = vmatprep.subr.mxu0 0.0
  %866 = vmatpush1.msra.mxu0 0.0
  %867 = vmatprep.subr.mxu0 0.0
  %868 = vmatpush1.msra.mxu0 0.0
  %869 = vmatprep.subr.mxu0 0.0
  %870 = vmatpush1.msra.mxu0 0.0
  %871 = vmatprep.subr.mxu0 0.0
  %872 = vmatpush1.msra.mxu0 0.0
  %873 = vmatprep.subr.mxu0 %v197
  %874 = vmatpush1.msra.mxu0 %v196
  %875 = vmatprep.subr.mxu0 %v165
  %876 = vmatpush1.msra.mxu0 %v164
  %877 = vmatprep.subr.mxu0 %v133
  %878 = vmatpush1.msra.mxu0 %v132
  %879 = vmatprep.subr.mxu0 %v101
  %880 = vmatpush1.msra.mxu0 %v100
  %881 = vmatprep.subr.mxu0 %v69
  %882 = vmatpush1.msra.mxu0 %v68
  %883 = vmatprep.subr.mxu0 %v37
  %884 = vmatpush1.msra.mxu0 %v36
  %885 = vmatprep.subr.mxu0 0.0
  %886 = vmatpush2.msra.mxu0 0.0
  %887 = vmatprep.subr.mxu0 0.0
  %888 = vmatpush2.msra.mxu0 0.0
  %889 = vmatprep.subr.mxu0 0.0
  %890 = vmatpush2.msra.mxu0 0.0
  %891 = vmatprep.subr.mxu0 0.0
  %892 = vmatpush2.msra.mxu0 0.0
  %893 = vmatprep.subr.mxu0 0.0
  %894 = vmatpush2.msra.mxu0 0.0
  %895 = vmatprep.subr.mxu0 0.0
  %896 = vmatpush2.msra.mxu0 0.0
  %897 = vmatprep.subr.mxu0 0.0
  %898 = vmatpush2.msra.mxu0 0.0
  %899 = vmatprep.subr.mxu0 0.0
  %900 = vmatpush2.msra.mxu0 0.0
  %901 = vmatprep.subr.mxu0 0.0
  %902 = vmatpush2.msra.mxu0 0.0
  %903 = vmatprep.subr.mxu0 0.0
  %904 = vmatpush2.msra.mxu0 0.0
  %905 = vmatprep.subr.mxu0 0.0
  %906 = vmatpush2.msra.mxu0 0.0
  %907 = vmatprep.subr.mxu0 0.0
  %908 = vmatpush2.msra.mxu0 0.0
  %909 = vmatprep.subr.mxu0 0.0
  %910 = vmatpush2.msra.mxu0 0.0
  %911 = vmatprep.subr.mxu0 0.0
  %912 = vmatpush2.msra.mxu0 0.0
  %913 = vmatprep.subr.mxu0 0.0
  %914 = vmatpush2.msra.mxu0 0.0
  %915 = vmatprep.subr.mxu0 0.0
  %916 = vmatpush2.msra.mxu0 0.0
  %917 = vmatprep.mubr.f32.mxu0 0.0
  %918 = vmatmul.mubr.f32.gmra.mxu0 %v212
  %v919 = vpop.f32.mrf.mxu0
  %v920 = vadd.f32 0.0, %v919
  %v921 = vpop.f32.mrf.mxu0
  %v922 = vadd.f32 0.0, %v921
  %923 = vdwg.mxu0
  %924 = vmatprep.subr.mxu0 0.0
  %925 = vmatpush1.msra.mxu0 0.0
  %926 = vmatprep.subr.mxu0 0.0
  %927 = vmatpush1.msra.mxu0 0.0
  %928 = vmatprep.subr.mxu0 0.0
  %929 = vmatpush1.msra.mxu0 0.0
  %930 = vmatprep.subr.mxu0 0.0
  %931 = vmatpush1.msra.mxu0 0.0
  %932 = vmatprep.subr.mxu0 0.0
  %933 = vmatpush1.msra.mxu0 0.0
  %934 = vmatprep.subr.mxu0 0.0
  %935 = vmatpush1.msra.mxu0 0.0
  %936 = vmatprep.subr.mxu0 0.0
  %937 = vmatpush1.msra.mxu0 0.0
  %938 = vmatprep.subr.mxu0 0.0
  %939 = vmatpush1.msra.mxu0 0.0
  %940 = vmatprep.subr.mxu0 0.0
  %941 = vmatpush1.msra.mxu0 0.0
  %942 = vmatprep.subr.mxu0 0.0
  %943 = vmatpush1.msra.mxu0 0.0
  %944 = vmatprep.subr.mxu0 %v199
  %945 = vmatpush1.msra.mxu0 %v198
  %946 = vmatprep.subr.mxu0 %v167
  %947 = vmatpush1.msra.mxu0 %v166
  %948 = vmatprep.subr.mxu0 %v135
  %949 = vmatpush1.msra.mxu0 %v134
  %950 = vmatprep.subr.mxu0 %v103
  %951 = vmatpush1.msra.mxu0 %v102
  %952 = vmatprep.subr.mxu0 %v71
  %953 = vmatpush1.msra.mxu0 %v70
  %954 = vmatprep.subr.mxu0 %v39
  %955 = vmatpush1.msra.mxu0 %v38
  %956 = vmatprep.subr.mxu0 0.0
  %957 = vmatpush2.msra.mxu0 0.0
  %958 = vmatprep.subr.mxu0 0.0
  %959 = vmatpush2.msra.mxu0 0.0
  %960 = vmatprep.subr.mxu0 0.0
  %961 = vmatpush2.msra.mxu0 0.0
  %962 = vmatprep.subr.mxu0 0.0
  %963 = vmatpush2.msra.mxu0 0.0
  %964 = vmatprep.subr.mxu0 0.0
  %965 = vmatpush2.msra.mxu0 0.0
  %966 = vmatprep.subr.mxu0 0.0
  %967 = vmatpush2.msra.mxu0 0.0
  %968 = vmatprep.subr.mxu0 0.0
  %969 = vmatpush2.msra.mxu0 0.0
  %970 = vmatprep.subr.mxu0 0.0
  %971 = vmatpush2.msra.mxu0 0.0
  %972 = vmatprep.subr.mxu0 0.0
  %973 = vmatpush2.msra.mxu0 0.0
  %974 = vmatprep.subr.mxu0 0.0
  %975 = vmatpush2.msra.mxu0 0.0
  %976 = vmatprep.subr.mxu0 0.0
  %977 = vmatpush2.msra.mxu0 0.0
  %978 = vmatprep.subr.mxu0 0.0
  %979 = vmatpush2.msra.mxu0 0.0
  %980 = vmatprep.subr.mxu0 0.0
  %981 = vmatpush2.msra.mxu0 0.0
  %982 = vmatprep.subr.mxu0 0.0
  %983 = vmatpush2.msra.mxu0 0.0
  %984 = vmatprep.subr.mxu0 0.0
  %985 = vmatpush2.msra.mxu0 0.0
  %986 = vmatprep.subr.mxu0 0.0
  %987 = vmatpush2.msra.mxu0 0.0
  %988 = vmatprep.mubr.f32.mxu0 0.0
  %989 = vmatmul.mubr.f32.gmra.mxu0 %v212
  %v990 = vpop.f32.mrf.mxu0
  %v991 = vadd.f32 0.0, %v990
  %v992 = vpop.f32.mrf.mxu0
  %v993 = vadd.f32 0.0, %v992
  %994 = vdwg.mxu0
  %995 = vmatprep.subr.mxu0 0.0
  %996 = vmatpush1.msra.mxu0 0.0
  %997 = vmatprep.subr.mxu0 0.0
  %998 = vmatpush1.msra.mxu0 0.0
  %999 = vmatprep.subr.mxu0 0.0
  %1000 = vmatpush1.msra.mxu0 0.0
  %1001 = vmatprep.subr.mxu0 0.0
  %1002 = vmatpush1.msra.mxu0 0.0
  %1003 = vmatprep.subr.mxu0 0.0
  %1004 = vmatpush1.msra.mxu0 0.0
  %1005 = vmatprep.subr.mxu0 0.0
  %1006 = vmatpush1.msra.mxu0 0.0
  %1007 = vmatprep.subr.mxu0 0.0
  %1008 = vmatpush1.msra.mxu0 0.0
  %1009 = vmatprep.subr.mxu0 0.0
  %1010 = vmatpush1.msra.mxu0 0.0
  %1011 = vmatprep.subr.mxu0 0.0
  %1012 = vmatpush1.msra.mxu0 0.0
  %1013 = vmatprep.subr.mxu0 0.0
  %1014 = vmatpush1.msra.mxu0 0.0
  %1015 = vmatprep.subr.mxu0 %v201
  %1016 = vmatpush1.msra.mxu0 %v200
  %1017 = vmatprep.subr.mxu0 %v169
  %1018 = vmatpush1.msra.mxu0 %v168
  %1019 = vmatprep.subr.mxu0 %v137
  %1020 = vmatpush1.msra.mxu0 %v136
  %1021 = vmatprep.subr.mxu0 %v105
  %1022 = vmatpush1.msra.mxu0 %v104
  %1023 = vmatprep.subr.mxu0 %v73
  %1024 = vmatpush1.msra.mxu0 %v72
  %1025 = vmatprep.subr.mxu0 %v41
  %1026 = vmatpush1.msra.mxu0 %v40
  %1027 = vmatprep.subr.mxu0 0.0
  %1028 = vmatpush2.msra.mxu0 0.0
  %1029 = vmatprep.subr.mxu0 0.0
  %1030 = vmatpush2.msra.mxu0 0.0
  %1031 = vmatprep.subr.mxu0 0.0
  %1032 = vmatpush2.msra.mxu0 0.0
  %1033 = vmatprep.subr.mxu0 0.0
  %1034 = vmatpush2.msra.mxu0 0.0
  %1035 = vmatprep.subr.mxu0 0.0
  %1036 = vmatpush2.msra.mxu0 0.0
  %1037 = vmatprep.subr.mxu0 0.0
  %1038 = vmatpush2.msra.mxu0 0.0
  %1039 = vmatprep.subr.mxu0 0.0
  %1040 = vmatpush2.msra.mxu0 0.0
  %1041 = vmatprep.subr.mxu0 0.0
  %1042 = vmatpush2.msra.mxu0 0.0
  %1043 = vmatprep.subr.mxu0 0.0
  %1044 = vmatpush2.msra.mxu0 0.0
  %1045 = vmatprep.subr.mxu0 0.0
  %1046 = vmatpush2.msra.mxu0 0.0
  %1047 = vmatprep.subr.mxu0 0.0
  %1048 = vmatpush2.msra.mxu0 0.0
  %1049 = vmatprep.subr.mxu0 0.0
  %1050 = vmatpush2.msra.mxu0 0.0
  %1051 = vmatprep.subr.mxu0 0.0
  %1052 = vmatpush2.msra.mxu0 0.0
  %1053 = vmatprep.subr.mxu0 0.0
  %1054 = vmatpush2.msra.mxu0 0.0
  %1055 = vmatprep.subr.mxu0 0.0
  %1056 = vmatpush2.msra.mxu0 0.0
  %1057 = vmatprep.subr.mxu0 0.0
  %1058 = vmatpush2.msra.mxu0 0.0
  %1059 = vmatprep.mubr.f32.mxu0 0.0
  %1060 = vmatmul.mubr.f32.gmra.mxu0 %v212
  %v1061 = vpop.f32.mrf.mxu0
  %v1062 = vadd.f32 0.0, %v1061
  %v1063 = vpop.f32.mrf.mxu0
  %v1064 = vadd.f32 0.0, %v1063
  %1065 = vdwg.mxu0
  %1066 = vmatprep.subr.mxu0 0.0
  %1067 = vmatpush1.msra.mxu0 0.0
  %1068 = vmatprep.subr.mxu0 0.0
  %1069 = vmatpush1.msra.mxu0 0.0
  %1070 = vmatprep.subr.mxu0 0.0
  %1071 = vmatpush1.msra.mxu0 0.0
  %1072 = vmatprep.subr.mxu0 0.0
  %1073 = vmatpush1.msra.mxu0 0.0
  %1074 = vmatprep.subr.mxu0 0.0
  %1075 = vmatpush1.msra.mxu0 0.0
  %1076 = vmatprep.subr.mxu0 0.0
  %1077 = vmatpush1.msra.mxu0 0.0
  %1078 = vmatprep.subr.mxu0 0.0
  %1079 = vmatpush1.msra.mxu0 0.0
  %1080 = vmatprep.subr.mxu0 0.0
  %1081 = vmatpush1.msra.mxu0 0.0
  %1082 = vmatprep.subr.mxu0 0.0
  %1083 = vmatpush1.msra.mxu0 0.0
  %1084 = vmatprep.subr.mxu0 0.0
  %1085 = vmatpush1.msra.mxu0 0.0
  %1086 = vmatprep.subr.mxu0 %v203
  %1087 = vmatpush1.msra.mxu0 %v202
  %1088 = vmatprep.subr.mxu0 %v171
  %1089 = vmatpush1.msra.mxu0 %v170
  %1090 = vmatprep.subr.mxu0 %v139
  %1091 = vmatpush1.msra.mxu0 %v138
  %1092 = vmatprep.subr.mxu0 %v107
  %1093 = vmatpush1.msra.mxu0 %v106
  %1094 = vmatprep.subr.mxu0 %v75
  %1095 = vmatpush1.msra.mxu0 %v74
  %1096 = vmatprep.subr.mxu0 %v43
  %1097 = vmatpush1.msra.mxu0 %v42
  %1098 = vmatprep.subr.mxu0 0.0
  %1099 = vmatpush2.msra.mxu0 0.0
  %1100 = vmatprep.subr.mxu0 0.0
  %1101 = vmatpush2.msra.mxu0 0.0
  %1102 = vmatprep.subr.mxu0 0.0
  %1103 = vmatpush2.msra.mxu0 0.0
  %1104 = vmatprep.subr.mxu0 0.0
  %1105 = vmatpush2.msra.mxu0 0.0
  %1106 = vmatprep.subr.mxu0 0.0
  %1107 = vmatpush2.msra.mxu0 0.0
  %1108 = vmatprep.subr.mxu0 0.0
  %1109 = vmatpush2.msra.mxu0 0.0
  %1110 = vmatprep.subr.mxu0 0.0
  %1111 = vmatpush2.msra.mxu0 0.0
  %1112 = vmatprep.subr.mxu0 0.0
  %1113 = vmatpush2.msra.mxu0 0.0
  %1114 = vmatprep.subr.mxu0 0.0
  %1115 = vmatpush2.msra.mxu0 0.0
  %1116 = vmatprep.subr.mxu0 0.0
  %1117 = vmatpush2.msra.mxu0 0.0
  %1118 = vmatprep.subr.mxu0 0.0
  %1119 = vmatpush2.msra.mxu0 0.0
  %1120 = vmatprep.subr.mxu0 0.0
  %1121 = vmatpush2.msra.mxu0 0.0
  %1122 = vmatprep.subr.mxu0 0.0
  %1123 = vmatpush2.msra.mxu0 0.0
  %1124 = vmatprep.subr.mxu0 0.0
  %1125 = vmatpush2.msra.mxu0 0.0
  %1126 = vmatprep.subr.mxu0 0.0
  %1127 = vmatpush2.msra.mxu0 0.0
  %1128 = vmatprep.subr.mxu0 0.0
  %1129 = vmatpush2.msra.mxu0 0.0
  %1130 = vmatprep.mubr.f32.mxu0 0.0
  %1131 = vmatmul.mubr.f32.gmra.mxu0 %v212
  %v1132 = vpop.f32.mrf.mxu0
  %v1133 = vadd.f32 0.0, %v1132
  %v1134 = vpop.f32.mrf.mxu0
  %v1135 = vadd.f32 0.0, %v1134
  %1136 = vdwg.mxu0
  %1137 = vmatprep.subr.mxu0 0.0
  %1138 = vmatpush1.msra.mxu0 0.0
  %1139 = vmatprep.subr.mxu0 0.0
  %1140 = vmatpush1.msra.mxu0 0.0
  %1141 = vmatprep.subr.mxu0 0.0
  %1142 = vmatpush1.msra.mxu0 0.0
  %1143 = vmatprep.subr.mxu0 0.0
  %1144 = vmatpush1.msra.mxu0 0.0
  %1145 = vmatprep.subr.mxu0 0.0
  %1146 = vmatpush1.msra.mxu0 0.0
  %1147 = vmatprep.subr.mxu0 0.0
  %1148 = vmatpush1.msra.mxu0 0.0
  %1149 = vmatprep.subr.mxu0 0.0
  %1150 = vmatpush1.msra.mxu0 0.0
  %1151 = vmatprep.subr.mxu0 0.0
  %1152 = vmatpush1.msra.mxu0 0.0
  %1153 = vmatprep.subr.mxu0 0.0
  %1154 = vmatpush1.msra.mxu0 0.0
  %1155 = vmatprep.subr.mxu0 0.0
  %1156 = vmatpush1.msra.mxu0 0.0
  %1157 = vmatprep.subr.mxu0 %v205
  %1158 = vmatpush1.msra.mxu0 %v204
  %1159 = vmatprep.subr.mxu0 %v173
  %1160 = vmatpush1.msra.mxu0 %v172
  %1161 = vmatprep.subr.mxu0 %v141
  %1162 = vmatpush1.msra.mxu0 %v140
  %1163 = vmatprep.subr.mxu0 %v109
  %1164 = vmatpush1.msra.mxu0 %v108
  %1165 = vmatprep.subr.mxu0 %v77
  %1166 = vmatpush1.msra.mxu0 %v76
  %1167 = vmatprep.subr.mxu0 %v45
  %1168 = vmatpush1.msra.mxu0 %v44
  %1169 = vmatprep.subr.mxu0 0.0
  %1170 = vmatpush2.msra.mxu0 0.0
  %1171 = vmatprep.subr.mxu0 0.0
  %1172 = vmatpush2.msra.mxu0 0.0
  %1173 = vmatprep.subr.mxu0 0.0
  %1174 = vmatpush2.msra.mxu0 0.0
  %1175 = vmatprep.subr.mxu0 0.0
  %1176 = vmatpush2.msra.mxu0 0.0
  %1177 = vmatprep.subr.mxu0 0.0
  %1178 = vmatpush2.msra.mxu0 0.0
  %1179 = vmatprep.subr.mxu0 0.0
  %1180 = vmatpush2.msra.mxu0 0.0
  %1181 = vmatprep.subr.mxu0 0.0
  %1182 = vmatpush2.msra.mxu0 0.0
  %1183 = vmatprep.subr.mxu0 0.0
  %1184 = vmatpush2.msra.mxu0 0.0
  %1185 = vmatprep.subr.mxu0 0.0
  %1186 = vmatpush2.msra.mxu0 0.0
  %1187 = vmatprep.subr.mxu0 0.0
  %1188 = vmatpush2.msra.mxu0 0.0
  %1189 = vmatprep.subr.mxu0 0.0
  %1190 = vmatpush2.msra.mxu0 0.0
  %1191 = vmatprep.subr.mxu0 0.0
  %1192 = vmatpush2.msra.mxu0 0.0
  %1193 = vmatprep.subr.mxu0 0.0
  %1194 = vmatpush2.msra.mxu0 0.0
  %1195 = vmatprep.subr.mxu0 0.0
  %1196 = vmatpush2.msra.mxu0 0.0
  %1197 = vmatprep.subr.mxu0 0.0
  %1198 = vmatpush2.msra.mxu0 0.0
  %1199 = vmatprep.subr.mxu0 0.0
  %1200 = vmatpush2.msra.mxu0 0.0
  %1201 = vmatprep.mubr.f32.mxu0 0.0
  %1202 = vmatmul.mubr.f32.gmra.mxu0 %v212
  %v1203 = vpop.f32.mrf.mxu0
  %v1204 = vadd.f32 0.0, %v1203
  %v1205 = vpop.f32.mrf.mxu0
  %v1206 = vadd.f32 0.0, %v1205
  %1207 = vdwg.mxu0
  %1208 = vmatprep.subr.mxu0 0.0
  %1209 = vmatpush1.msra.mxu0 0.0
  %1210 = vmatprep.subr.mxu0 0.0
  %1211 = vmatpush1.msra.mxu0 0.0
  %1212 = vmatprep.subr.mxu0 0.0
  %1213 = vmatpush1.msra.mxu0 0.0
  %1214 = vmatprep.subr.mxu0 0.0
  %1215 = vmatpush1.msra.mxu0 0.0
  %1216 = vmatprep.subr.mxu0 0.0
  %1217 = vmatpush1.msra.mxu0 0.0
  %1218 = vmatprep.subr.mxu0 0.0
  %1219 = vmatpush1.msra.mxu0 0.0
  %1220 = vmatprep.subr.mxu0 0.0
  %1221 = vmatpush1.msra.mxu0 0.0
  %1222 = vmatprep.subr.mxu0 0.0
  %1223 = vmatpush1.msra.mxu0 0.0
  %1224 = vmatprep.subr.mxu0 0.0
  %1225 = vmatpush1.msra.mxu0 0.0
  %1226 = vmatprep.subr.mxu0 0.0
  %1227 = vmatpush1.msra.mxu0 0.0
  %1228 = vmatprep.subr.mxu0 %v207
  %1229 = vmatpush1.msra.mxu0 %v206
  %1230 = vmatprep.subr.mxu0 %v175
  %1231 = vmatpush1.msra.mxu0 %v174
  %1232 = vmatprep.subr.mxu0 %v143
  %1233 = vmatpush1.msra.mxu0 %v142
  %1234 = vmatprep.subr.mxu0 %v111
  %1235 = vmatpush1.msra.mxu0 %v110
  %1236 = vmatprep.subr.mxu0 %v79
  %1237 = vmatpush1.msra.mxu0 %v78
  %1238 = vmatprep.subr.mxu0 %v47
  %1239 = vmatpush1.msra.mxu0 %v46
  %1240 = vmatprep.subr.mxu0 0.0
  %1241 = vmatpush2.msra.mxu0 0.0
  %1242 = vmatprep.subr.mxu0 0.0
  %1243 = vmatpush2.msra.mxu0 0.0
  %1244 = vmatprep.subr.mxu0 0.0
  %1245 = vmatpush2.msra.mxu0 0.0
  %1246 = vmatprep.subr.mxu0 0.0
  %1247 = vmatpush2.msra.mxu0 0.0
  %1248 = vmatprep.subr.mxu0 0.0
  %1249 = vmatpush2.msra.mxu0 0.0
  %1250 = vmatprep.subr.mxu0 0.0
  %1251 = vmatpush2.msra.mxu0 0.0
  %1252 = vmatprep.subr.mxu0 0.0
  %1253 = vmatpush2.msra.mxu0 0.0
  %1254 = vmatprep.subr.mxu0 0.0
  %1255 = vmatpush2.msra.mxu0 0.0
  %1256 = vmatprep.subr.mxu0 0.0
  %1257 = vmatpush2.msra.mxu0 0.0
  %1258 = vmatprep.subr.mxu0 0.0
  %1259 = vmatpush2.msra.mxu0 0.0
  %1260 = vmatprep.subr.mxu0 0.0
  %1261 = vmatpush2.msra.mxu0 0.0
  %1262 = vmatprep.subr.mxu0 0.0
  %1263 = vmatpush2.msra.mxu0 0.0
  %1264 = vmatprep.subr.mxu0 0.0
  %1265 = vmatpush2.msra.mxu0 0.0
  %1266 = vmatprep.subr.mxu0 0.0
  %1267 = vmatpush2.msra.mxu0 0.0
  %1268 = vmatprep.subr.mxu0 0.0
  %1269 = vmatpush2.msra.mxu0 0.0
  %1270 = vmatprep.subr.mxu0 0.0
  %1271 = vmatpush2.msra.mxu0 0.0
  %1272 = vmatprep.mubr.f32.mxu0 0.0
  %1273 = vmatmul.mubr.f32.gmra.mxu0 %v212
  %v1274 = vpop.f32.mrf.mxu0
  %v1275 = vadd.f32 0.0, %v1274
  %v1276 = vpop.f32.mrf.mxu0
  %v1277 = vadd.f32 0.0, %v1276
  %1278 = vdwg.mxu0
  %1279 = vmatprep.subr.mxu0 0.0
  %1280 = vmatpush1.msra.mxu0 0.0
  %1281 = vmatprep.subr.mxu0 0.0
  %1282 = vmatpush1.msra.mxu0 0.0
  %1283 = vmatprep.subr.mxu0 0.0
  %1284 = vmatpush1.msra.mxu0 0.0
  %1285 = vmatprep.subr.mxu0 0.0
  %1286 = vmatpush1.msra.mxu0 0.0
  %1287 = vmatprep.subr.mxu0 0.0
  %1288 = vmatpush1.msra.mxu0 0.0
  %1289 = vmatprep.subr.mxu0 0.0
  %1290 = vmatpush1.msra.mxu0 0.0
  %1291 = vmatprep.subr.mxu0 0.0
  %1292 = vmatpush1.msra.mxu0 0.0
  %1293 = vmatprep.subr.mxu0 0.0
  %1294 = vmatpush1.msra.mxu0 0.0
  %1295 = vmatprep.subr.mxu0 0.0
  %1296 = vmatpush1.msra.mxu0 0.0
  %1297 = vmatprep.subr.mxu0 0.0
  %1298 = vmatpush1.msra.mxu0 0.0
  %1299 = vmatprep.subr.mxu0 %v209
  %1300 = vmatpush1.msra.mxu0 %v208
  %1301 = vmatprep.subr.mxu0 %v177
  %1302 = vmatpush1.msra.mxu0 %v176
  %1303 = vmatprep.subr.mxu0 %v145
  %1304 = vmatpush1.msra.mxu0 %v144
  %1305 = vmatprep.subr.mxu0 %v113
  %1306 = vmatpush1.msra.mxu0 %v112
  %1307 = vmatprep.subr.mxu0 %v81
  %1308 = vmatpush1.msra.mxu0 %v80
  %1309 = vmatprep.subr.mxu0 %v49
  %1310 = vmatpush1.msra.mxu0 %v48
  %1311 = vmatprep.subr.mxu0 0.0
  %1312 = vmatpush2.msra.mxu0 0.0
  %1313 = vmatprep.subr.mxu0 0.0
  %1314 = vmatpush2.msra.mxu0 0.0
  %1315 = vmatprep.subr.mxu0 0.0
  %1316 = vmatpush2.msra.mxu0 0.0
  %1317 = vmatprep.subr.mxu0 0.0
  %1318 = vmatpush2.msra.mxu0 0.0
  %1319 = vmatprep.subr.mxu0 0.0
  %1320 = vmatpush2.msra.mxu0 0.0
  %1321 = vmatprep.subr.mxu0 0.0
  %1322 = vmatpush2.msra.mxu0 0.0
  %1323 = vmatprep.subr.mxu0 0.0
  %1324 = vmatpush2.msra.mxu0 0.0
  %1325 = vmatprep.subr.mxu0 0.0
  %1326 = vmatpush2.msra.mxu0 0.0
  %1327 = vmatprep.subr.mxu0 0.0
  %1328 = vmatpush2.msra.mxu0 0.0
  %1329 = vmatprep.subr.mxu0 0.0
  %1330 = vmatpush2.msra.mxu0 0.0
  %1331 = vmatprep.subr.mxu0 0.0
  %1332 = vmatpush2.msra.mxu0 0.0
  %1333 = vmatprep.subr.mxu0 0.0
  %1334 = vmatpush2.msra.mxu0 0.0
  %1335 = vmatprep.subr.mxu0 0.0
  %1336 = vmatpush2.msra.mxu0 0.0
  %1337 = vmatprep.subr.mxu0 0.0
  %1338 = vmatpush2.msra.mxu0 0.0
  %1339 = vmatprep.subr.mxu0 0.0
  %1340 = vmatpush2.msra.mxu0 0.0
  %1341 = vmatprep.subr.mxu0 0.0
  %1342 = vmatpush2.msra.mxu0 0.0
  %1343 = vmatprep.mubr.f32.mxu0 0.0
  %1344 = vmatmul.mubr.f32.gmra.mxu0 %v212
  %v1345 = vpop.f32.mrf.mxu0
  %v1346 = vadd.f32 0.0, %v1345
  %v1347 = vpop.f32.mrf.mxu0
  %v1348 = vadd.f32 0.0, %v1347
  %1349 = vdwg.mxu0
  %v1350 = vadd.f32 %v281, %v283
  %v1351 = vadd.f32 %v1350, %v352
  %v1352 = vadd.f32 %v1351, %v354
  %v1353 = vadd.f32 %v1352, %v423
  %v1354 = vadd.f32 %v1353, %v425
  %v1355 = vadd.f32 %v1354, %v494
  %v1356 = vadd.f32 %v1355, %v496
  %v1357 = vadd.f32 %v1356, %v565
  %v1358 = vadd.f32 %v1357, %v567
  %v1359 = vadd.f32 %v1358, %v636
  %v1360 = vadd.f32 %v1359, %v638
  %v1361 = vadd.f32 %v1360, %v707
  %v1362 = vadd.f32 %v1361, %v709
  %v1363 = vadd.f32 %v1362, %v778
  %v1364 = vadd.f32 %v1363, %v780
  %v1365 = vadd.f32 %v1364, %v849
  %v1366 = vadd.f32 %v1365, %v851
  %v1367 = vadd.f32 %v1366, %v920
  %v1368 = vadd.f32 %v1367, %v922
  %v1369 = vadd.f32 %v1368, %v991
  %v1370 = vadd.f32 %v1369, %v993
  %v1371 = vadd.f32 %v1370, %v1062
  %v1372 = vadd.f32 %v1371, %v1064
  %v1373 = vadd.f32 %v1372, %v1133
  %v1374 = vadd.f32 %v1373, %v1135
  %v1375 = vadd.f32 %v1374, %v1204
  %v1376 = vadd.f32 %v1375, %v1206
  %v1377 = vadd.f32 %v1376, %v1275
  %v1378 = vadd.f32 %v1377, %v1277
  %v1379 = vadd.f32 %v1378, %v1346
  %v1380 = vadd.f32 %v1379, %v1348
  %1381 = vadd.xlane.f32.xlu0 %v1380
  %v1382 = vpop.xlane.xlu0 %1381
  %v1383 = vmul.f32 %v1382, 0.00024414063
  %v1384 = vmul.f32 %v281, %v281
  %v1385 = vmul.f32 %v283, %v283
  %v1386 = vmul.f32 %v352, %v352
  %v1387 = vmul.f32 %v354, %v354
  %v1388 = vmul.f32 %v423, %v423
  %v1389 = vmul.f32 %v425, %v425
  %v1390 = vmul.f32 %v494, %v494
  %v1391 = vmul.f32 %v496, %v496
  %v1392 = vmul.f32 %v565, %v565
  %v1393 = vmul.f32 %v567, %v567
  %v1394 = vmul.f32 %v636, %v636
  %v1395 = vmul.f32 %v638, %v638
  %v1396 = vmul.f32 %v707, %v707
  %v1397 = vmul.f32 %v709, %v709
  %v1398 = vmul.f32 %v778, %v778
  %v1399 = vmul.f32 %v780, %v780
  %v1400 = vmul.f32 %v849, %v849
  %v1401 = vmul.f32 %v851, %v851
  %v1402 = vmul.f32 %v920, %v920
  %v1403 = vmul.f32 %v922, %v922
  %v1404 = vmul.f32 %v991, %v991
  %v1405 = vmul.f32 %v993, %v993
  %v1406 = vmul.f32 %v1062, %v1062
  %v1407 = vmul.f32 %v1064, %v1064
  %v1408 = vmul.f32 %v1133, %v1133
  %v1409 = vmul.f32 %v1135, %v1135
  %v1410 = vmul.f32 %v1204, %v1204
  %v1411 = vmul.f32 %v1206, %v1206
  %v1412 = vmul.f32 %v1275, %v1275
  %v1413 = vmul.f32 %v1277, %v1277
  %v1414 = vmul.f32 %v1346, %v1346
  %v1415 = vmul.f32 %v1348, %v1348
  %v1416 = vadd.f32 %v1384, %v1385
  %v1417 = vadd.f32 %v1416, %v1386
  %v1418 = vadd.f32 %v1417, %v1387
  %v1419 = vadd.f32 %v1418, %v1388
  %v1420 = vadd.f32 %v1419, %v1389
  %v1421 = vadd.f32 %v1420, %v1390
  %v1422 = vadd.f32 %v1421, %v1391
  %v1423 = vadd.f32 %v1422, %v1392
  %v1424 = vadd.f32 %v1423, %v1393
  %v1425 = vadd.f32 %v1424, %v1394
  %v1426 = vadd.f32 %v1425, %v1395
  %v1427 = vadd.f32 %v1426, %v1396
  %v1428 = vadd.f32 %v1427, %v1397
  %v1429 = vadd.f32 %v1428, %v1398
  %v1430 = vadd.f32 %v1429, %v1399
  %v1431 = vadd.f32 %v1430, %v1400
  %v1432 = vadd.f32 %v1431, %v1401
  %v1433 = vadd.f32 %v1432, %v1402
  %v1434 = vadd.f32 %v1433, %v1403
  %v1435 = vadd.f32 %v1434, %v1404
  %v1436 = vadd.f32 %v1435, %v1405
  %v1437 = vadd.f32 %v1436, %v1406
  %v1438 = vadd.f32 %v1437, %v1407
  %v1439 = vadd.f32 %v1438, %v1408
  %v1440 = vadd.f32 %v1439, %v1409
  %v1441 = vadd.f32 %v1440, %v1410
  %v1442 = vadd.f32 %v1441, %v1411
  %v1443 = vadd.f32 %v1442, %v1412
  %v1444 = vadd.f32 %v1443, %v1413
  %v1445 = vadd.f32 %v1444, %v1414
  %v1446 = vadd.f32 %v1445, %v1415
  %1447 = vadd.xlane.f32.xlu0 %v1446
  %v1448 = vpop.xlane.xlu0 %1447
  %v1449 = vmul.f32 %v1448, 0.00024414063
  %v1450 = vmul.f32 %v1383, %v1383
  %v1451 = vsub.f32 %v1449, %v1450
  %v1452 = vmax.f32 %v1451, 0.0
  %v1453 = vld [vmem:[%s2] sm:$0xff]
  %v1454 = vadd.f32 %v1452, 1e-05
  %v1455 = vrsqrt.pop %v1454
  %v1456 = vmul.f32 %v1453, %v1455
  %v1457 = vld [vmem:[%s3] sm:$0xff]
  %v1458 = vmul.f32 %v1383, %v1456
  %v1459 = vsub.f32 %v1457, %v1458
  %1461 = vset.pattern.permute.xlu0 0
  %1462 = vperm.xlu0 %1461, %v1456
  %v1463 = vpop.permute.xlu0 %1462
  %v1465 = vmul.f32 %v281, %v1463
  %v1466 = vmul.f32 %v283, %v1463
  %v1467 = vmul.f32 %v352, %v1463
  %v1468 = vmul.f32 %v354, %v1463
  %v1469 = vmul.f32 %v423, %v1463
  %v1470 = vmul.f32 %v425, %v1463
  %v1471 = vmul.f32 %v494, %v1463
  %v1472 = vmul.f32 %v496, %v1463
  %v1473 = vmul.f32 %v565, %v1463
  %v1474 = vmul.f32 %v567, %v1463
  %v1475 = vmul.f32 %v636, %v1463
  %v1476 = vmul.f32 %v638, %v1463
  %v1477 = vmul.f32 %v707, %v1463
  %v1478 = vmul.f32 %v709, %v1463
  %v1479 = vmul.f32 %v778, %v1463
  %v1480 = vmul.f32 %v780, %v1463
  %v1481 = vmul.f32 %v849, %v1463
  %v1482 = vmul.f32 %v851, %v1463
  %v1483 = vmul.f32 %v920, %v1463
  %v1484 = vmul.f32 %v922, %v1463
  %v1485 = vmul.f32 %v991, %v1463
  %v1486 = vmul.f32 %v993, %v1463
  %v1487 = vmul.f32 %v1062, %v1463
  %v1488 = vmul.f32 %v1064, %v1463
  %v1489 = vmul.f32 %v1133, %v1463
  %v1490 = vmul.f32 %v1135, %v1463
  %v1491 = vmul.f32 %v1204, %v1463
  %v1492 = vmul.f32 %v1206, %v1463
  %v1493 = vmul.f32 %v1275, %v1463
  %v1494 = vmul.f32 %v1277, %v1463
  %v1495 = vmul.f32 %v1346, %v1463
  %v1496 = vmul.f32 %v1348, %v1463
  %1498 = vset.pattern.permute.xlu0 0
  %1499 = vperm.xlu0 %1498, %v1459
  %v1500 = vpop.permute.xlu0 %1499
  %v1502 = vadd.f32 %v1465, %v1500
  %v1503 = vadd.f32 %v1466, %v1500
  %v1504 = vadd.f32 %v1467, %v1500
  %v1505 = vadd.f32 %v1468, %v1500
  %v1506 = vadd.f32 %v1469, %v1500
  %v1507 = vadd.f32 %v1470, %v1500
  %v1508 = vadd.f32 %v1471, %v1500
  %v1509 = vadd.f32 %v1472, %v1500
  %v1510 = vadd.f32 %v1473, %v1500
  %v1511 = vadd.f32 %v1474, %v1500
  %v1512 = vadd.f32 %v1475, %v1500
  %v1513 = vadd.f32 %v1476, %v1500
  %v1514 = vadd.f32 %v1477, %v1500
  %v1515 = vadd.f32 %v1478, %v1500
  %v1516 = vadd.f32 %v1479, %v1500
  %v1517 = vadd.f32 %v1480, %v1500
  %v1518 = vadd.f32 %v1481, %v1500
  %v1519 = vadd.f32 %v1482, %v1500
  %v1520 = vadd.f32 %v1483, %v1500
  %v1521 = vadd.f32 %v1484, %v1500
  %v1522 = vadd.f32 %v1485, %v1500
  %v1523 = vadd.f32 %v1486, %v1500
  %v1524 = vadd.f32 %v1487, %v1500
  %v1525 = vadd.f32 %v1488, %v1500
  %v1526 = vadd.f32 %v1489, %v1500
  %v1527 = vadd.f32 %v1490, %v1500
  %v1528 = vadd.f32 %v1491, %v1500
  %v1529 = vadd.f32 %v1492, %v1500
  %v1530 = vadd.f32 %v1493, %v1500
  %v1531 = vadd.f32 %v1494, %v1500
  %v1532 = vadd.f32 %v1495, %v1500
  %v1533 = vadd.f32 %v1496, %v1500
  %v1534 = vmax.f32 %v1502, 0.0
  %v1535 = vmax.f32 %v1503, 0.0
  %v1536 = vmax.f32 %v1504, 0.0
  %v1537 = vmax.f32 %v1505, 0.0
  %v1538 = vmax.f32 %v1506, 0.0
  %v1539 = vmax.f32 %v1507, 0.0
  %v1540 = vmax.f32 %v1508, 0.0
  %v1541 = vmax.f32 %v1509, 0.0
  %v1542 = vmax.f32 %v1510, 0.0
  %v1543 = vmax.f32 %v1511, 0.0
  %v1544 = vmax.f32 %v1512, 0.0
  %v1545 = vmax.f32 %v1513, 0.0
  %v1546 = vmax.f32 %v1514, 0.0
  %v1547 = vmax.f32 %v1515, 0.0
  %v1548 = vmax.f32 %v1516, 0.0
  %v1549 = vmax.f32 %v1517, 0.0
  %v1550 = vmax.f32 %v1518, 0.0
  %v1551 = vmax.f32 %v1519, 0.0
  %v1552 = vmax.f32 %v1520, 0.0
  %v1553 = vmax.f32 %v1521, 0.0
  %v1554 = vmax.f32 %v1522, 0.0
  %v1555 = vmax.f32 %v1523, 0.0
  %v1556 = vmax.f32 %v1524, 0.0
  %v1557 = vmax.f32 %v1525, 0.0
  %v1558 = vmax.f32 %v1526, 0.0
  %v1559 = vmax.f32 %v1527, 0.0
  %v1560 = vmax.f32 %v1528, 0.0
  %v1561 = vmax.f32 %v1529, 0.0
  %v1562 = vmax.f32 %v1530, 0.0
  %v1563 = vmax.f32 %v1531, 0.0
  %v1564 = vmax.f32 %v1532, 0.0
  %v1565 = vmax.f32 %v1533, 0.0
  %1566 = vst [vmem:[%s4] sm:$0xff] %v1534
  %1567 = vst [vmem:[%s4 + $0x8] sm:$0xff] %v1535
  %1568 = vst [vmem:[%s4 + $0x10] sm:$0xff] %v1536
  %1569 = vst [vmem:[%s4 + $0x18] sm:$0xff] %v1537
  %1570 = vst [vmem:[%s4 + $0x20] sm:$0xff] %v1538
  %1571 = vst [vmem:[%s4 + $0x28] sm:$0xff] %v1539
  %1572 = vst [vmem:[%s4 + $0x30] sm:$0xff] %v1540
  %1573 = vst [vmem:[%s4 + $0x38] sm:$0xff] %v1541
  %1574 = vst [vmem:[%s4 + $0x40] sm:$0xff] %v1542
  %1575 = vst [vmem:[%s4 + $0x48] sm:$0xff] %v1543
  %1576 = vst [vmem:[%s4 + $0x50] sm:$0xff] %v1544
  %1577 = vst [vmem:[%s4 + $0x58] sm:$0xff] %v1545
  %1578 = vst [vmem:[%s4 + $0x60] sm:$0xff] %v1546
  %1579 = vst [vmem:[%s4 + $0x68] sm:$0xff] %v1547
  %1580 = vst [vmem:[%s4 + $0x70] sm:$0xff] %v1548
  %1581 = vst [vmem:[%s4 + $0x78] sm:$0xff] %v1549
  %1582 = vst [vmem:[%s4 + $0x80] sm:$0xff] %v1550
  %1583 = vst [vmem:[%s4 + $0x88] sm:$0xff] %v1551
  %1584 = vst [vmem:[%s4 + $0x90] sm:$0xff] %v1552
  %1585 = vst [vmem:[%s4 + $0x98] sm:$0xff] %v1553
  %1586 = vst [vmem:[%s4 + $0xa0] sm:$0xff] %v1554
  %1587 = vst [vmem:[%s4 + $0xa8] sm:$0xff] %v1555
  %1588 = vst [vmem:[%s4 + $0xb0] sm:$0xff] %v1556
  %1589 = vst [vmem:[%s4 + $0xb8] sm:$0xff] %v1557
  %1590 = vst [vmem:[%s4 + $0xc0] sm:$0xff] %v1558
  %1591 = vst [vmem:[%s4 + $0xc8] sm:$0xff] %v1559
  %1592 = vst [vmem:[%s4 + $0xd0] sm:$0xff] %v1560
  %1593 = vst [vmem:[%s4 + $0xd8] sm:$0xff] %v1561
  %1594 = vst [vmem:[%s4 + $0xe0] sm:$0xff] %v1562
  %1595 = vst [vmem:[%s4 + $0xe8] sm:$0xff] %v1563
  %1596 = vst [vmem:[%s4 + $0xf0] sm:$0xff] %v1564
  %1597 = vst [vmem:[%s4 + $0xf8] sm:$0xff] %v1565
  // Predicated region
  $region18: #{_lambda_.3} parent=0 // pred_check
    _
  $region19: #{_lambda_.3} parent=0 // pred_check_branch
    %1599 = sbr.rel (0) target = $region21
  $region20: #{_lambda_.3} parent=0 // pred_region
    _
  $region21: #{_lambda_.3} parent=0 // pred_fallthru
    _
  // Predicated region
  $region22: #{_lambda_.3} parent=0 // pred_check
    _
  $region23: #{_lambda_.3} parent=0 // pred_check_branch
    %1601 = sbr.rel (0) target = $region25
  $region24: #{_lambda_.3} parent=0 // pred_region
    _
  $region25: #{_lambda_.3} parent=0 // pred_fallthru
    _

// kernel: _lambda_.4
$region0: #{_lambda_.4}
  #allocation0 [shape = 'u32[]', space=smem, size = 0x4, offset = 0x4, fixed_abs, tag = 'smem constant byte address 0x4 - core index']
  #allocation1 [shape = 'u32[144,128]{1,0:T(1,128)}', space=vmem, size = 0x12000, scoped, tag = 'internal scratch']
  %s0 = inlined_call_operand.vmem [shape: f32[16,128], index: 0, kind: input, shape index: {}]
  %s1 = inlined_call_operand.vmem [shape: f32[128,1024], index: 1, kind: input, shape index: {}]
  %s2 = inlined_call_operand.vmem [shape: f32[16,1], index: 2, kind: input, shape index: {}]
  %s3 = inlined_call_operand.vmem [shape: f32[16,1], index: 3, kind: input, shape index: {}]
  %s4 = inlined_call_operand.vmem [shape: f32[16,1024], index: 4, kind: output, shape index: {}]
  %s5 = sld [smem:[#allocation0]]
  $region26: #{_lambda_.4} parent=0
    _
  %s7 = ssub.s32 1, %s5
  %s8 = scalar_select 0, %s7, %s5
  // Predicated region
  $region2: #{_lambda_.4} parent=0 // pred_check
    _
  $region3: #{_lambda_.4} parent=0 // pred_check_branch
    %10 = sbr.rel (0) target = $region5
  $region4: #{_lambda_.4} parent=0 // pred_region
    _
  $region5: #{_lambda_.4} parent=0 // pred_fallthru
    _
  // Predicated region
  $region6: #{_lambda_.4} parent=0 // pred_check
    _
  $region7: #{_lambda_.4} parent=0 // pred_check_branch
    %12 = sbr.rel (0) target = $region9
  $region8: #{_lambda_.4} parent=0 // pred_region
    _
  $region9: #{_lambda_.4} parent=0 // pred_fallthru
    _
  // Predicated region
  $region10: #{_lambda_.4} parent=0 // pred_check
    _
  $region11: #{_lambda_.4} parent=0 // pred_check_branch
    %14 = sbr.rel (0) target = $region13
  $region12: #{_lambda_.4} parent=0 // pred_region
    _
  $region13: #{_lambda_.4} parent=0 // pred_fallthru
    _
  // Predicated region
  $region14: #{_lambda_.4} parent=0 // pred_check
    _
  $region15: #{_lambda_.4} parent=0 // pred_check_branch
    %16 = sbr.rel (0) target = $region17
  $region16: #{_lambda_.4} parent=0 // pred_region
    _
  $region17: #{_lambda_.4} parent=0 // pred_fallthru
    _
  %v17 = vld [vmem:[%s0] sm:$0xff]
  %v18 = vld [vmem:[%s0 + $0x8] sm:$0xff]
  %v19 = vld [vmem:[%s1] sm:$0xff]
  %v20 = vld [vmem:[%s1 + $0x8] sm:$0xff]
  %v21 = vld [vmem:[%s1 + $0x10] sm:$0xff]
  %v22 = vld [vmem:[%s1 + $0x18] sm:$0xff]
  %v23 = vld [vmem:[%s1 + $0x20] sm:$0xff]
  %v24 = vld [vmem:[%s1 + $0x28] sm:$0xff]
  %v25 = vld [vmem:[%s1 + $0x30] sm:$0xff]
  %v26 = vld [vmem:[%s1 + $0x38] sm:$0xff]
  %v27 = vld [vmem:[%s1 + $0x40] sm:$0xff]
  %v28 = vld [vmem:[%s1 + $0x48] sm:$0xff]
  %v29 = vld [vmem:[%s1 + $0x50] sm:$0xff]
  %v30 = vld [vmem:[%s1 + $0x58] sm:$0xff]
  %v31 = vld [vmem:[%s1 + $0x60] sm:$0xff]
  %v32 = vld [vmem:[%s1 + $0x68] sm:$0xff]
  %v33 = vld [vmem:[%s1 + $0x70] sm:$0xff]
  %v34 = vld [vmem:[%s1 + $0x78] sm:$0xff]
  %v35 = vld [vmem:[%s1 + $0x80] sm:$0xff]
  %v36 = vld [vmem:[%s1 + $0x88] sm:$0xff]
  %v37 = vld [vmem:[%s1 + $0x90] sm:$0xff]
  %v38 = vld [vmem:[%s1 + $0x98] sm:$0xff]
  %v39 = vld [vmem:[%s1 + $0xa0] sm:$0xff]
  %v40 = vld [vmem:[%s1 + $0xa8] sm:$0xff]
  %v41 = vld [vmem:[%s1 + $0xb0] sm:$0xff]
  %v42 = vld [vmem:[%s1 + $0xb8] sm:$0xff]
  %v43 = vld [vmem:[%s1 + $0xc0] sm:$0xff]
  %v44 = vld [vmem:[%s1 + $0xc8] sm:$0xff]
  %v45 = vld [vmem:[%s1 + $0xd0] sm:$0xff]
  %v46 = vld [vmem:[%s1 + $0xd8] sm:$0xff]
  %v47 = vld [vmem:[%s1 + $0xe0] sm:$0xff]
  %v48 = vld [vmem:[%s1 + $0xe8] sm:$0xff]
  %v49 = vld [vmem:[%s1 + $0xf0] sm:$0xff]
  %v50 = vld [vmem:[%s1 + $0xf8] sm:$0xff]
  %v51 = vld [vmem:[%s1 + $0x100] sm:$0xff]
  %v52 = vld [vmem:[%s1 + $0x108] sm:$0xff]
  %v53 = vld [vmem:[%s1 + $0x110] sm:$0xff]
  %v54 = vld [vmem:[%s1 + $0x118] sm:$0xff]
  %v55 = vld [vmem:[%s1 + $0x120] sm:$0xff]
  %v56 = vld [vmem:[%s1 + $0x128] sm:$0xff]
  %v57 = vld [vmem:[%s1 + $0x130] sm:$0xff]
  %v58 = vld [vmem:[%s1 + $0x138] sm:$0xff]
  %v59 = vld [vmem:[%s1 + $0x140] sm:$0xff]
  %v60 = vld [vmem:[%s1 + $0x148] sm:$0xff]
  %v61 = vld [vmem:[%s1 + $0x150] sm:$0xff]
  %v62 = vld [vmem:[%s1 + $0x158] sm:$0xff]
  %v63 = vld [vmem:[%s1 + $0x160] sm:$0xff]
  %v64 = vld [vmem:[%s1 + $0x168] sm:$0xff]
  %v65 = vld [vmem:[%s1 + $0x170] sm:$0xff]
  %v66 = vld [vmem:[%s1 + $0x178] sm:$0xff]
  %v67 = vld [vmem:[%s1 + $0x180] sm:$0xff]
  %v68 = vld [vmem:[%s1 + $0x188] sm:$0xff]
  %v69 = vld [vmem:[%s1 + $0x190] sm:$0xff]
  %v70 = vld [vmem:[%s1 + $0x198] sm:$0xff]
  %v71 = vld [vmem:[%s1 + $0x1a0] sm:$0xff]
  %v72 = vld [vmem:[%s1 + $0x1a8] sm:$0xff]
  %v73 = vld [vmem:[%s1 + $0x1b0] sm:$0xff]
  %v74 = vld [vmem:[%s1 + $0x1b8] sm:$0xff]
  %v75 = vld [vmem:[%s1 + $0x1c0] sm:$0xff]
  %v76 = vld [vmem:[%s1 + $0x1c8] sm:$0xff]
  %v77 = vld [vmem:[%s1 + $0x1d0] sm:$0xff]
  %v78 = vld [vmem:[%s1 + $0x1d8] sm:$0xff]
  %v79 = vld [vmem:[%s1 + $0x1e0] sm:$0xff]
  %v80 = vld [vmem:[%s1 + $0x1e8] sm:$0xff]
  %v81 = vld [vmem:[%s1 + $0x1f0] sm:$0xff]
  %v82 = vld [vmem:[%s1 + $0x1f8] sm:$0xff]
  %v83 = vld [vmem:[%s1 + $0x200] sm:$0xff]
  %v84 = vld [vmem:[%s1 + $0x208] sm:$0xff]
  %v85 = vld [vmem:[%s1 + $0x210] sm:$0xff]
  %v86 = vld [vmem:[%s1 + $0x218] sm:$0xff]
  %v87 = vld [vmem:[%s1 + $0x220] sm:$0xff]
  %v88 = vld [vmem:[%s1 + $0x228] sm:$0xff]
  %v89 = vld [vmem:[%s1 + $0x230] sm:$0xff]
  %v90 = vld [vmem:[%s1 + $0x238] sm:$0xff]
  %v91 = vld [vmem:[%s1 + $0x240] sm:$0xff]
  %v92 = vld [vmem:[%s1 + $0x248] sm:$0xff]
  %v93 = vld [vmem:[%s1 + $0x250] sm:$0xff]
  %v94 = vld [vmem:[%s1 + $0x258] sm:$0xff]
  %v95 = vld [vmem:[%s1 + $0x260] sm:$0xff]
  %v96 = vld [vmem:[%s1 + $0x268] sm:$0xff]
  %v97 = vld [vmem:[%s1 + $0x270] sm:$0xff]
  %v98 = vld [vmem:[%s1 + $0x278] sm:$0xff]
  %v99 = vld [vmem:[%s1 + $0x280] sm:$0xff]
  %v100 = vld [vmem:[%s1 + $0x288] sm:$0xff]
  %v101 = vld [vmem:[%s1 + $0x290] sm:$0xff]
  %v102 = vld [vmem:[%s1 + $0x298] sm:$0xff]
  %v103 = vld [vmem:[%s1 + $0x2a0] sm:$0xff]
  %v104 = vld [vmem:[%s1 + $0x2a8] sm:$0xff]
  %v105 = vld [vmem:[%s1 + $0x2b0] sm:$0xff]
  %v106 = vld [vmem:[%s1 + $0x2b8] sm:$0xff]
  %v107 = vld [vmem:[%s1 + $0x2c0] sm:$0xff]
  %v108 = vld [vmem:[%s1 + $0x2c8] sm:$0xff]
  %v109 = vld [vmem:[%s1 + $0x2d0] sm:$0xff]
  %v110 = vld [vmem:[%s1 + $0x2d8] sm:$0xff]
  %v111 = vld [vmem:[%s1 + $0x2e0] sm:$0xff]
  %v112 = vld [vmem:[%s1 + $0x2e8] sm:$0xff]
  %v113 = vld [vmem:[%s1 + $0x2f0] sm:$0xff]
  %v114 = vld [vmem:[%s1 + $0x2f8] sm:$0xff]
  %v115 = vld [vmem:[%s1 + $0x300] sm:$0xff]
  %v116 = vld [vmem:[%s1 + $0x308] sm:$0xff]
  %v117 = vld [vmem:[%s1 + $0x310] sm:$0xff]
  %v118 = vld [vmem:[%s1 + $0x318] sm:$0xff]
  %v119 = vld [vmem:[%s1 + $0x320] sm:$0xff]
  %v120 = vld [vmem:[%s1 + $0x328] sm:$0xff]
  %v121 = vld [vmem:[%s1 + $0x330] sm:$0xff]
  %v122 = vld [vmem:[%s1 + $0x338] sm:$0xff]
  %v123 = vld [vmem:[%s1 + $0x340] sm:$0xff]
  %v124 = vld [vmem:[%s1 + $0x348] sm:$0xff]
  %v125 = vld [vmem:[%s1 + $0x350] sm:$0xff]
  %v126 = vld [vmem:[%s1 + $0x358] sm:$0xff]
  %v127 = vld [vmem:[%s1 + $0x360] sm:$0xff]
  %v128 = vld [vmem:[%s1 + $0x368] sm:$0xff]
  %v129 = vld [vmem:[%s1 + $0x370] sm:$0xff]
  %v130 = vld [vmem:[%s1 + $0x378] sm:$0xff]
  %v131 = vld [vmem:[%s1 + $0x380] sm:$0xff]
  %v132 = vld [vmem:[%s1 + $0x388] sm:$0xff]
  %v133 = vld [vmem:[%s1 + $0x390] sm:$0xff]
  %v134 = vld [vmem:[%s1 + $0x398] sm:$0xff]
  %v135 = vld [vmem:[%s1 + $0x3a0] sm:$0xff]
  %v136 = vld [vmem:[%s1 + $0x3a8] sm:$0xff]
  %v137 = vld [vmem:[%s1 + $0x3b0] sm:$0xff]
  %v138 = vld [vmem:[%s1 + $0x3b8] sm:$0xff]
  %v139 = vld [vmem:[%s1 + $0x3c0] sm:$0xff]
  %v140 = vld [vmem:[%s1 + $0x3c8] sm:$0xff]
  %v141 = vld [vmem:[%s1 + $0x3d0] sm:$0xff]
  %v142 = vld [vmem:[%s1 + $0x3d8] sm:$0xff]
  %v143 = vld [vmem:[%s1 + $0x3e0] sm:$0xff]
  %v144 = vld [vmem:[%s1 + $0x3e8] sm:$0xff]
  %v145 = vld [vmem:[%s1 + $0x3f0] sm:$0xff]
  %v146 = vld [vmem:[%s1 + $0x3f8] sm:$0xff]
  %147 = vmatprep.subr.mxu0 %v140
  %148 = vmatpush1.msra.mxu0 %v139
  %149 = vmatprep.subr.mxu0 %v132
  %150 = vmatpush1.msra.mxu0 %v131
  %151 = vmatprep.subr.mxu0 %v124
  %152 = vmatpush1.msra.mxu0 %v123
  %153 = vmatprep.subr.mxu0 %v116
  %154 = vmatpush1.msra.mxu0 %v115
  %155 = vmatprep.subr.mxu0 %v108
  %156 = vmatpush1.msra.mxu0 %v107
  %157 = vmatprep.subr.mxu0 %v100
  %158 = vmatpush1.msra.mxu0 %v99
  %159 = vmatprep.subr.mxu0 %v92
  %160 = vmatpush1.msra.mxu0 %v91
  %161 = vmatprep.subr.mxu0 %v84
  %162 = vmatpush1.msra.mxu0 %v83
  %163 = vmatprep.subr.mxu0 %v76
  %164 = vmatpush1.msra.mxu0 %v75
  %165 = vmatprep.subr.mxu0 %v68
  %166 = vmatpush1.msra.mxu0 %v67
  %167 = vmatprep.subr.mxu0 %v60
  %168 = vmatpush1.msra.mxu0 %v59
  %169 = vmatprep.subr.mxu0 %v52
  %170 = vmatpush1.msra.mxu0 %v51
  %171 = vmatprep.subr.mxu0 %v44
  %172 = vmatpush1.msra.mxu0 %v43
  %173 = vmatprep.subr.mxu0 %v36
  %174 = vmatpush1.msra.mxu0 %v35
  %175 = vmatprep.subr.mxu0 %v28
  %176 = vmatpush1.msra.mxu0 %v27
  %177 = vmatprep.subr.mxu0 %v20
  %178 = vmatpush1.msra.mxu0 %v19
  %179 = vmatprep.subr.mxu0 0.0
  %180 = vmatpush2.msra.mxu0 0.0
  %181 = vmatprep.subr.mxu0 0.0
  %182 = vmatpush2.msra.mxu0 0.0
  %183 = vmatprep.subr.mxu0 0.0
  %184 = vmatpush2.msra.mxu0 0.0
  %185 = vmatprep.subr.mxu0 0.0
  %186 = vmatpush2.msra.mxu0 0.0
  %187 = vmatprep.subr.mxu0 0.0
  %188 = vmatpush2.msra.mxu0 0.0
  %189 = vmatprep.subr.mxu0 0.0
  %190 = vmatpush2.msra.mxu0 0.0
  %191 = vmatprep.subr.mxu0 0.0
  %192 = vmatpush2.msra.mxu0 0.0
  %193 = vmatprep.subr.mxu0 0.0
  %194 = vmatpush2.msra.mxu0 0.0
  %195 = vmatprep.subr.mxu0 0.0
  %196 = vmatpush2.msra.mxu0 0.0
  %197 = vmatprep.subr.mxu0 0.0
  %198 = vmatpush2.msra.mxu0 0.0
  %199 = vmatprep.subr.mxu0 0.0
  %200 = vmatpush2.msra.mxu0 0.0
  %201 = vmatprep.subr.mxu0 0.0
  %202 = vmatpush2.msra.mxu0 0.0
  %203 = vmatprep.subr.mxu0 0.0
  %204 = vmatpush2.msra.mxu0 0.0
  %205 = vmatprep.subr.mxu0 0.0
  %206 = vmatpush2.msra.mxu0 0.0
  %207 = vmatprep.subr.mxu0 0.0
  %208 = vmatpush2.msra.mxu0 0.0
  %209 = vmatprep.subr.mxu0 0.0
  %210 = vmatpush2.msra.mxu0 0.0
  %211 = vmatprep.mubr.f32.mxu0 0.0
  %212 = vmatmul.mubr.f32.gmra.mxu0 %v17
  %v213 = vpop.f32.mrf.mxu0
  %v214 = vadd.f32 0.0, %v213
  %v215 = vpop.f32.mrf.mxu0
  %v216 = vadd.f32 0.0, %v215
  %217 = vmatprep.mubr.f32.mxu0 0.0
  %218 = vmatmul.mubr.f32.gmra.mxu0 %v18
  %v219 = vpop.f32.mrf.mxu0
  %v220 = vadd.f32 0.0, %v219
  %v221 = vpop.f32.mrf.mxu0
  %v222 = vadd.f32 0.0, %v221
  %223 = vdwg.mxu0
  %224 = vmatprep.subr.mxu0 %v142
  %225 = vmatpush1.msra.mxu0 %v141
  %226 = vmatprep.subr.mxu0 %v134
  %227 = vmatpush1.msra.mxu0 %v133
  %228 = vmatprep.subr.mxu0 %v126
  %229 = vmatpush1.msra.mxu0 %v125
  %230 = vmatprep.subr.mxu0 %v118
  %231 = vmatpush1.msra.mxu0 %v117
  %232 = vmatprep.subr.mxu0 %v110
  %233 = vmatpush1.msra.mxu0 %v109
  %234 = vmatprep.subr.mxu0 %v102
  %235 = vmatpush1.msra.mxu0 %v101
  %236 = vmatprep.subr.mxu0 %v94
  %237 = vmatpush1.msra.mxu0 %v93
  %238 = vmatprep.subr.mxu0 %v86
  %239 = vmatpush1.msra.mxu0 %v85
  %240 = vmatprep.subr.mxu0 %v78
  %241 = vmatpush1.msra.mxu0 %v77
  %242 = vmatprep.subr.mxu0 %v70
  %243 = vmatpush1.msra.mxu0 %v69
  %244 = vmatprep.subr.mxu0 %v62
  %245 = vmatpush1.msra.mxu0 %v61
  %246 = vmatprep.subr.mxu0 %v54
  %247 = vmatpush1.msra.mxu0 %v53
  %248 = vmatprep.subr.mxu0 %v46
  %249 = vmatpush1.msra.mxu0 %v45
  %250 = vmatprep.subr.mxu0 %v38
  %251 = vmatpush1.msra.mxu0 %v37
  %252 = vmatprep.subr.mxu0 %v30
  %253 = vmatpush1.msra.mxu0 %v29
  %254 = vmatprep.subr.mxu0 %v22
  %255 = vmatpush1.msra.mxu0 %v21
  %256 = vmatprep.subr.mxu0 0.0
  %257 = vmatpush2.msra.mxu0 0.0
  %258 = vmatprep.subr.mxu0 0.0
  %259 = vmatpush2.msra.mxu0 0.0
  %260 = vmatprep.subr.mxu0 0.0
  %261 = vmatpush2.msra.mxu0 0.0
  %262 = vmatprep.subr.mxu0 0.0
  %263 = vmatpush2.msra.mxu0 0.0
  %264 = vmatprep.subr.mxu0 0.0
  %265 = vmatpush2.msra.mxu0 0.0
  %266 = vmatprep.subr.mxu0 0.0
  %267 = vmatpush2.msra.mxu0 0.0
  %268 = vmatprep.subr.mxu0 0.0
  %269 = vmatpush2.msra.mxu0 0.0
  %270 = vmatprep.subr.mxu0 0.0
  %271 = vmatpush2.msra.mxu0 0.0
  %272 = vmatprep.subr.mxu0 0.0
  %273 = vmatpush2.msra.mxu0 0.0
  %274 = vmatprep.subr.mxu0 0.0
  %275 = vmatpush2.msra.mxu0 0.0
  %276 = vmatprep.subr.mxu0 0.0
  %277 = vmatpush2.msra.mxu0 0.0
  %278 = vmatprep.subr.mxu0 0.0
  %279 = vmatpush2.msra.mxu0 0.0
  %280 = vmatprep.subr.mxu0 0.0
  %281 = vmatpush2.msra.mxu0 0.0
  %282 = vmatprep.subr.mxu0 0.0
  %283 = vmatpush2.msra.mxu0 0.0
  %284 = vmatprep.subr.mxu0 0.0
  %285 = vmatpush2.msra.mxu0 0.0
  %286 = vmatprep.subr.mxu0 0.0
  %287 = vmatpush2.msra.mxu0 0.0
  %288 = vmatprep.mubr.f32.mxu0 0.0
  %289 = vmatmul.mubr.f32.gmra.mxu0 %v17
  %v290 = vpop.f32.mrf.mxu0
  %v291 = vadd.f32 0.0, %v290
  %v292 = vpop.f32.mrf.mxu0
  %v293 = vadd.f32 0.0, %v292
  %294 = vmatprep.mubr.f32.mxu0 0.0
  %295 = vmatmul.mubr.f32.gmra.mxu0 %v18
  %v296 = vpop.f32.mrf.mxu0
  %v297 = vadd.f32 0.0, %v296
  %v298 = vpop.f32.mrf.mxu0
  %v299 = vadd.f32 0.0, %v298
  %300 = vdwg.mxu0
  %301 = vmatprep.subr.mxu0 %v144
  %302 = vmatpush1.msra.mxu0 %v143
  %303 = vmatprep.subr.mxu0 %v136
  %304 = vmatpush1.msra.mxu0 %v135
  %305 = vmatprep.subr.mxu0 %v128
  %306 = vmatpush1.msra.mxu0 %v127
  %307 = vmatprep.subr.mxu0 %v120
  %308 = vmatpush1.msra.mxu0 %v119
  %309 = vmatprep.subr.mxu0 %v112
  %310 = vmatpush1.msra.mxu0 %v111
  %311 = vmatprep.subr.mxu0 %v104
  %312 = vmatpush1.msra.mxu0 %v103
  %313 = vmatprep.subr.mxu0 %v96
  %314 = vmatpush1.msra.mxu0 %v95
  %315 = vmatprep.subr.mxu0 %v88
  %316 = vmatpush1.msra.mxu0 %v87
  %317 = vmatprep.subr.mxu0 %v80
  %318 = vmatpush1.msra.mxu0 %v79
  %319 = vmatprep.subr.mxu0 %v72
  %320 = vmatpush1.msra.mxu0 %v71
  %321 = vmatprep.subr.mxu0 %v64
  %322 = vmatpush1.msra.mxu0 %v63
  %323 = vmatprep.subr.mxu0 %v56
  %324 = vmatpush1.msra.mxu0 %v55
  %325 = vmatprep.subr.mxu0 %v48
  %326 = vmatpush1.msra.mxu0 %v47
  %327 = vmatprep.subr.mxu0 %v40
  %328 = vmatpush1.msra.mxu0 %v39
  %329 = vmatprep.subr.mxu0 %v32
  %330 = vmatpush1.msra.mxu0 %v31
  %331 = vmatprep.subr.mxu0 %v24
  %332 = vmatpush1.msra.mxu0 %v23
  %333 = vmatprep.subr.mxu0 0.0
  %334 = vmatpush2.msra.mxu0 0.0
  %335 = vmatprep.subr.mxu0 0.0
  %336 = vmatpush2.msra.mxu0 0.0
  %337 = vmatprep.subr.mxu0 0.0
  %338 = vmatpush2.msra.mxu0 0.0
  %339 = vmatprep.subr.mxu0 0.0
  %340 = vmatpush2.msra.mxu0 0.0
  %341 = vmatprep.subr.mxu0 0.0
  %342 = vmatpush2.msra.mxu0 0.0
  %343 = vmatprep.subr.mxu0 0.0
  %344 = vmatpush2.msra.mxu0 0.0
  %345 = vmatprep.subr.mxu0 0.0
  %346 = vmatpush2.msra.mxu0 0.0
  %347 = vmatprep.subr.mxu0 0.0
  %348 = vmatpush2.msra.mxu0 0.0
  %349 = vmatprep.subr.mxu0 0.0
  %350 = vmatpush2.msra.mxu0 0.0
  %351 = vmatprep.subr.mxu0 0.0
  %352 = vmatpush2.msra.mxu0 0.0
  %353 = vmatprep.subr.mxu0 0.0
  %354 = vmatpush2.msra.mxu0 0.0
  %355 = vmatprep.subr.mxu0 0.0
  %356 = vmatpush2.msra.mxu0 0.0
  %357 = vmatprep.subr.mxu0 0.0
  %358 = vmatpush2.msra.mxu0 0.0
  %359 = vmatprep.subr.mxu0 0.0
  %360 = vmatpush2.msra.mxu0 0.0
  %361 = vmatprep.subr.mxu0 0.0
  %362 = vmatpush2.msra.mxu0 0.0
  %363 = vmatprep.subr.mxu0 0.0
  %364 = vmatpush2.msra.mxu0 0.0
  %365 = vmatprep.mubr.f32.mxu0 0.0
  %366 = vmatmul.mubr.f32.gmra.mxu0 %v17
  %v367 = vpop.f32.mrf.mxu0
  %v368 = vadd.f32 0.0, %v367
  %v369 = vpop.f32.mrf.mxu0
  %v370 = vadd.f32 0.0, %v369
  %371 = vmatprep.mubr.f32.mxu0 0.0
  %372 = vmatmul.mubr.f32.gmra.mxu0 %v18
  %v373 = vpop.f32.mrf.mxu0
  %v374 = vadd.f32 0.0, %v373
  %v375 = vpop.f32.mrf.mxu0
  %v376 = vadd.f32 0.0, %v375
  %377 = vdwg.mxu0
  %378 = vmatprep.subr.mxu0 %v146
  %379 = vmatpush1.msra.mxu0 %v145
  %380 = vmatprep.subr.mxu0 %v138
  %381 = vmatpush1.msra.mxu0 %v137
  %382 = vmatprep.subr.mxu0 %v130
  %383 = vmatpush1.msra.mxu0 %v129
  %384 = vmatprep.subr.mxu0 %v122
  %385 = vmatpush1.msra.mxu0 %v121
  %386 = vmatprep.subr.mxu0 %v114
  %387 = vmatpush1.msra.mxu0 %v113
  %388 = vmatprep.subr.mxu0 %v106
  %389 = vmatpush1.msra.mxu0 %v105
  %390 = vmatprep.subr.mxu0 %v98
  %391 = vmatpush1.msra.mxu0 %v97
  %392 = vmatprep.subr.mxu0 %v90
  %393 = vmatpush1.msra.mxu0 %v89
  %394 = vmatprep.subr.mxu0 %v82
  %395 = vmatpush1.msra.mxu0 %v81
  %396 = vmatprep.subr.mxu0 %v74
  %397 = vmatpush1.msra.mxu0 %v73
  %398 = vmatprep.subr.mxu0 %v66
  %399 = vmatpush1.msra.mxu0 %v65
  %400 = vmatprep.subr.mxu0 %v58
  %401 = vmatpush1.msra.mxu0 %v57
  %402 = vmatprep.subr.mxu0 %v50
  %403 = vmatpush1.msra.mxu0 %v49
  %404 = vmatprep.subr.mxu0 %v42
  %405 = vmatpush1.msra.mxu0 %v41
  %406 = vmatprep.subr.mxu0 %v34
  %407 = vmatpush1.msra.mxu0 %v33
  %408 = vmatprep.subr.mxu0 %v26
  %409 = vmatpush1.msra.mxu0 %v25
  %410 = vmatprep.subr.mxu0 0.0
  %411 = vmatpush2.msra.mxu0 0.0
  %412 = vmatprep.subr.mxu0 0.0
  %413 = vmatpush2.msra.mxu0 0.0
  %414 = vmatprep.subr.mxu0 0.0
  %415 = vmatpush2.msra.mxu0 0.0
  %416 = vmatprep.subr.mxu0 0.0
  %417 = vmatpush2.msra.mxu0 0.0
  %418 = vmatprep.subr.mxu0 0.0
  %419 = vmatpush2.msra.mxu0 0.0
  %420 = vmatprep.subr.mxu0 0.0
  %421 = vmatpush2.msra.mxu0 0.0
  %422 = vmatprep.subr.mxu0 0.0
  %423 = vmatpush2.msra.mxu0 0.0
  %424 = vmatprep.subr.mxu0 0.0
  %425 = vmatpush2.msra.mxu0 0.0
  %426 = vmatprep.subr.mxu0 0.0
  %427 = vmatpush2.msra.mxu0 0.0
  %428 = vmatprep.subr.mxu0 0.0
  %429 = vmatpush2.msra.mxu0 0.0
  %430 = vmatprep.subr.mxu0 0.0
  %431 = vmatpush2.msra.mxu0 0.0
  %432 = vmatprep.subr.mxu0 0.0
  %433 = vmatpush2.msra.mxu0 0.0
  %434 = vmatprep.subr.mxu0 0.0
  %435 = vmatpush2.msra.mxu0 0.0
  %436 = vmatprep.subr.mxu0 0.0
  %437 = vmatpush2.msra.mxu0 0.0
  %438 = vmatprep.subr.mxu0 0.0
  %439 = vmatpush2.msra.mxu0 0.0
  %440 = vmatprep.subr.mxu0 0.0
  %441 = vmatpush2.msra.mxu0 0.0
  %442 = vmatprep.mubr.f32.mxu0 0.0
  %443 = vmatmul.mubr.f32.gmra.mxu0 %v17
  %v444 = vpop.f32.mrf.mxu0
  %v445 = vadd.f32 0.0, %v444
  %v446 = vpop.f32.mrf.mxu0
  %v447 = vadd.f32 0.0, %v446
  %448 = vmatprep.mubr.f32.mxu0 0.0
  %449 = vmatmul.mubr.f32.gmra.mxu0 %v18
  %v450 = vpop.f32.mrf.mxu0
  %v451 = vadd.f32 0.0, %v450
  %v452 = vpop.f32.mrf.mxu0
  %v453 = vadd.f32 0.0, %v452
  %454 = vdwg.mxu0
  %v455 = vadd.f32 %v214, %v216
  %v456 = vadd.f32 %v455, %v291
  %v457 = vadd.f32 %v456, %v293
  %v458 = vadd.f32 %v457, %v368
  %v459 = vadd.f32 %v458, %v370
  %v460 = vadd.f32 %v459, %v445
  %v461 = vadd.f32 %v460, %v447
  %462 = vadd.xlane.f32.xlu0 %v461
  %v463 = vpop.xlane.xlu0 %462
  %v464 = vadd.f32 %v220, %v222
  %v465 = vadd.f32 %v464, %v297
  %v466 = vadd.f32 %v465, %v299
  %v467 = vadd.f32 %v466, %v374
  %v468 = vadd.f32 %v467, %v376
  %v469 = vadd.f32 %v468, %v451
  %v470 = vadd.f32 %v469, %v453
  %471 = vadd.xlane.f32.xlu0 %v470
  %v472 = vpop.xlane.xlu0 %471
  %v473 = vmul.f32 %v463, 0.0009765625
  %v474 = vmul.f32 %v472, 0.0009765625
  %v475 = vmul.f32 %v214, %v214
  %v476 = vmul.f32 %v216, %v216
  %v477 = vmul.f32 %v291, %v291
  %v478 = vmul.f32 %v293, %v293
  %v479 = vmul.f32 %v368, %v368
  %v480 = vmul.f32 %v370, %v370
  %v481 = vmul.f32 %v445, %v445
  %v482 = vmul.f32 %v447, %v447
  %v483 = vmul.f32 %v220, %v220
  %v484 = vmul.f32 %v222, %v222
  %v485 = vmul.f32 %v297, %v297
  %v486 = vmul.f32 %v299, %v299
  %v487 = vmul.f32 %v374, %v374
  %v488 = vmul.f32 %v376, %v376
  %v489 = vmul.f32 %v451, %v451
  %v490 = vmul.f32 %v453, %v453
  %v491 = vadd.f32 %v475, %v476
  %v492 = vadd.f32 %v491, %v477
  %v493 = vadd.f32 %v492, %v478
  %v494 = vadd.f32 %v493, %v479
  %v495 = vadd.f32 %v494, %v480
  %v496 = vadd.f32 %v495, %v481
  %v497 = vadd.f32 %v496, %v482
  %498 = vadd.xlane.f32.xlu0 %v497
  %v499 = vpop.xlane.xlu0 %498
  %v500 = vadd.f32 %v483, %v484
  %v501 = vadd.f32 %v500, %v485
  %v502 = vadd.f32 %v501, %v486
  %v503 = vadd.f32 %v502, %v487
  %v504 = vadd.f32 %v503, %v488
  %v505 = vadd.f32 %v504, %v489
  %v506 = vadd.f32 %v505, %v490
  %507 = vadd.xlane.f32.xlu0 %v506
  %v508 = vpop.xlane.xlu0 %507
  %v509 = vmul.f32 %v499, 0.0009765625
  %v510 = vmul.f32 %v508, 0.0009765625
  %v511 = vmul.f32 %v473, %v473
  %v512 = vmul.f32 %v474, %v474
  %v513 = vsub.f32 %v509, %v511
  %v514 = vsub.f32 %v510, %v512
  %v515 = vmax.f32 %v513, 0.0
  %v516 = vmax.f32 %v514, 0.0
  %v517 = vld [vmem:[%s2] sm:$0xff]
  %v518 = vld [vmem:[%s2 + $0x8] sm:$0xff]
  %v519 = vadd.f32 %v515, 1e-05
  %v520 = vadd.f32 %v516, 1e-05
  %v521 = vrsqrt.pop %v519
  %v522 = vrsqrt.pop %v520
  %v523 = vmul.f32 %v517, %v521
  %v524 = vmul.f32 %v518, %v522
  %v525 = vld [vmem:[%s3] sm:$0xff]
  %v526 = vld [vmem:[%s3 + $0x8] sm:$0xff]
  %v527 = vmul.f32 %v473, %v523
  %v528 = vmul.f32 %v474, %v524
  %v529 = vsub.f32 %v525, %v527
  %v530 = vsub.f32 %v526, %v528
  %532 = vset.pattern.permute.xlu0 0
  %533 = vperm.xlu0 %532, %v523
  %v534 = vpop.permute.xlu0 %533
  %537 = vset.pattern.permute.xlu0 0
  %538 = vperm.xlu0 %537, %v524
  %v539 = vpop.permute.xlu0 %538
  %v541 = vmul.f32 %v214, %v534
  %v542 = vmul.f32 %v216, %v534
  %v543 = vmul.f32 %v291, %v534
  %v544 = vmul.f32 %v293, %v534
  %v545 = vmul.f32 %v368, %v534
  %v546 = vmul.f32 %v370, %v534
  %v547 = vmul.f32 %v445, %v534
  %v548 = vmul.f32 %v447, %v534
  %v549 = vmul.f32 %v220, %v539
  %v550 = vmul.f32 %v222, %v539
  %v551 = vmul.f32 %v297, %v539
  %v552 = vmul.f32 %v299, %v539
  %v553 = vmul.f32 %v374, %v539
  %v554 = vmul.f32 %v376, %v539
  %v555 = vmul.f32 %v451, %v539
  %v556 = vmul.f32 %v453, %v539
  %558 = vset.pattern.permute.xlu0 0
  %559 = vperm.xlu0 %558, %v529
  %v560 = vpop.permute.xlu0 %559
  %563 = vset.pattern.permute.xlu0 0
  %564 = vperm.xlu0 %563, %v530
  %v565 = vpop.permute.xlu0 %564
  %v567 = vadd.f32 %v541, %v560
  %v568 = vadd.f32 %v542, %v560
  %v569 = vadd.f32 %v543, %v560
  %v570 = vadd.f32 %v544, %v560
  %v571 = vadd.f32 %v545, %v560
  %v572 = vadd.f32 %v546, %v560
  %v573 = vadd.f32 %v547, %v560
  %v574 = vadd.f32 %v548, %v560
  %v575 = vadd.f32 %v549, %v565
  %v576 = vadd.f32 %v550, %v565
  %v577 = vadd.f32 %v551, %v565
  %v578 = vadd.f32 %v552, %v565
  %v579 = vadd.f32 %v553, %v565
  %v580 = vadd.f32 %v554, %v565
  %v581 = vadd.f32 %v555, %v565
  %v582 = vadd.f32 %v556, %v565
  %v583 = vmax.f32 %v567, 0.0
  %v584 = vmax.f32 %v568, 0.0
  %v585 = vmax.f32 %v569, 0.0
  %v586 = vmax.f32 %v570, 0.0
  %v587 = vmax.f32 %v571, 0.0
  %v588 = vmax.f32 %v572, 0.0
  %v589 = vmax.f32 %v573, 0.0
  %v590 = vmax.f32 %v574, 0.0
  %v591 = vmax.f32 %v575, 0.0
  %v592 = vmax.f32 %v576, 0.0
  %v593 = vmax.f32 %v577, 0.0
  %v594 = vmax.f32 %v578, 0.0
  %v595 = vmax.f32 %v579, 0.0
  %v596 = vmax.f32 %v580, 0.0
  %v597 = vmax.f32 %v581, 0.0
  %v598 = vmax.f32 %v582, 0.0
  %599 = vst [vmem:[%s4] sm:$0xff] %v583
  %600 = vst [vmem:[%s4 + $0x8] sm:$0xff] %v584
  %601 = vst [vmem:[%s4 + $0x10] sm:$0xff] %v585
  %602 = vst [vmem:[%s4 + $0x18] sm:$0xff] %v586
  %603 = vst [vmem:[%s4 + $0x20] sm:$0xff] %v587
  %604 = vst [vmem:[%s4 + $0x28] sm:$0xff] %v588
  %605 = vst [vmem:[%s4 + $0x30] sm:$0xff] %v589
  %606 = vst [vmem:[%s4 + $0x38] sm:$0xff] %v590
  %607 = vst [vmem:[%s4 + $0x40] sm:$0xff] %v591
  %608 = vst [vmem:[%s4 + $0x48] sm:$0xff] %v592
  %609 = vst [vmem:[%s4 + $0x50] sm:$0xff] %v593
  %610 = vst [vmem:[%s4 + $0x58] sm:$0xff] %v594
  %611 = vst [vmem:[%s4 + $0x60] sm:$0xff] %v595
  %612 = vst [vmem:[%s4 + $0x68] sm:$0xff] %v596
  %613 = vst [vmem:[%s4 + $0x70] sm:$0xff] %v597
  %614 = vst [vmem:[%s4 + $0x78] sm:$0xff] %v598
  // Predicated region
  $region18: #{_lambda_.4} parent=0 // pred_check
    _
  $region19: #{_lambda_.4} parent=0 // pred_check_branch
    %616 = sbr.rel (0) target = $region21
  $region20: #{_lambda_.4} parent=0 // pred_region
    _
  $region21: #{_lambda_.4} parent=0 // pred_fallthru
    _
  // Predicated region
  $region22: #{_lambda_.4} parent=0 // pred_check
    _
  $region23: #{_lambda_.4} parent=0 // pred_check_branch
    %618 = sbr.rel (0) target = $region25
  $region24: #{_lambda_.4} parent=0 // pred_region
    _
  $region25: #{_lambda_.4} parent=0 // pred_fallthru
    _

// kernel: _lambda_.5
$region0: #{_lambda_.5}
  #allocation0 [shape = 'u32[]', space=smem, size = 0x4, offset = 0x4, fixed_abs, tag = 'smem constant byte address 0x4 - core index']
  #allocation1 [shape = 'u32[144,128]{1,0:T(1,128)}', space=vmem, size = 0x12000, scoped, tag = 'internal scratch']
  %s0 = inlined_call_operand.vmem [shape: f32[32,256], index: 0, kind: input, shape index: {}]
  %s1 = inlined_call_operand.vmem [shape: f32[256,256], index: 1, kind: input, shape index: {}]
  %s2 = inlined_call_operand.vmem [shape: f32[32,1], index: 2, kind: input, shape index: {}]
  %s3 = inlined_call_operand.vmem [shape: f32[32,1], index: 3, kind: input, shape index: {}]
  %s4 = inlined_call_operand.vmem [shape: f32[32,256], index: 4, kind: output, shape index: {}]
  %s5 = sld [smem:[#allocation0]]
  $region26: #{_lambda_.5} parent=0
    _
  %s7 = ssub.s32 1, %s5
  %s8 = scalar_select 0, %s7, %s5
  // Predicated region
  $region2: #{_lambda_.5} parent=0 // pred_check
    _
  $region3: #{_lambda_.5} parent=0 // pred_check_branch
    %10 = sbr.rel (0) target = $region5
  $region4: #{_lambda_.5} parent=0 // pred_region
    _
  $region5: #{_lambda_.5} parent=0 // pred_fallthru
    _
  // Predicated region
  $region6: #{_lambda_.5} parent=0 // pred_check
    _
  $region7: #{_lambda_.5} parent=0 // pred_check_branch
    %12 = sbr.rel (0) target = $region9
  $region8: #{_lambda_.5} parent=0 // pred_region
    _
  $region9: #{_lambda_.5} parent=0 // pred_fallthru
    _
  // Predicated region
  $region10: #{_lambda_.5} parent=0 // pred_check
    _
  $region11: #{_lambda_.5} parent=0 // pred_check_branch
    %14 = sbr.rel (0) target = $region13
  $region12: #{_lambda_.5} parent=0 // pred_region
    _
  $region13: #{_lambda_.5} parent=0 // pred_fallthru
    _
  // Predicated region
  $region14: #{_lambda_.5} parent=0 // pred_check
    _
  $region15: #{_lambda_.5} parent=0 // pred_check_branch
    %16 = sbr.rel (0) target = $region17
  $region16: #{_lambda_.5} parent=0 // pred_region
    _
  $region17: #{_lambda_.5} parent=0 // pred_fallthru
    _
  %v17 = vld [vmem:[%s0] sm:$0xff]
  %v18 = vld [vmem:[%s0 + $0x8] sm:$0xff]
  %v19 = vld [vmem:[%s0 + $0x10] sm:$0xff]
  %v20 = vld [vmem:[%s0 + $0x18] sm:$0xff]
  %v21 = vld [vmem:[%s0 + $0x20] sm:$0xff]
  %v22 = vld [vmem:[%s0 + $0x28] sm:$0xff]
  %v23 = vld [vmem:[%s0 + $0x30] sm:$0xff]
  %v24 = vld [vmem:[%s0 + $0x38] sm:$0xff]
  %v25 = vld [vmem:[%s1] sm:$0xff]
  %v26 = vld [vmem:[%s1 + $0x8] sm:$0xff]
  %v27 = vld [vmem:[%s1 + $0x10] sm:$0xff]
  %v28 = vld [vmem:[%s1 + $0x18] sm:$0xff]
  %v29 = vld [vmem:[%s1 + $0x20] sm:$0xff]
  %v30 = vld [vmem:[%s1 + $0x28] sm:$0xff]
  %v31 = vld [vmem:[%s1 + $0x30] sm:$0xff]
  %v32 = vld [vmem:[%s1 + $0x38] sm:$0xff]
  %v33 = vld [vmem:[%s1 + $0x40] sm:$0xff]
  %v34 = vld [vmem:[%s1 + $0x48] sm:$0xff]
  %v35 = vld [vmem:[%s1 + $0x50] sm:$0xff]
  %v36 = vld [vmem:[%s1 + $0x58] sm:$0xff]
  %v37 = vld [vmem:[%s1 + $0x60] sm:$0xff]
  %v38 = vld [vmem:[%s1 + $0x68] sm:$0xff]
  %v39 = vld [vmem:[%s1 + $0x70] sm:$0xff]
  %v40 = vld [vmem:[%s1 + $0x78] sm:$0xff]
  %v41 = vld [vmem:[%s1 + $0x80] sm:$0xff]
  %v42 = vld [vmem:[%s1 + $0x88] sm:$0xff]
  %v43 = vld [vmem:[%s1 + $0x90] sm:$0xff]
  %v44 = vld [vmem:[%s1 + $0x98] sm:$0xff]
  %v45 = vld [vmem:[%s1 + $0xa0] sm:$0xff]
  %v46 = vld [vmem:[%s1 + $0xa8] sm:$0xff]
  %v47 = vld [vmem:[%s1 + $0xb0] sm:$0xff]
  %v48 = vld [vmem:[%s1 + $0xb8] sm:$0xff]
  %v49 = vld [vmem:[%s1 + $0xc0] sm:$0xff]
  %v50 = vld [vmem:[%s1 + $0xc8] sm:$0xff]
  %v51 = vld [vmem:[%s1 + $0xd0] sm:$0xff]
  %v52 = vld [vmem:[%s1 + $0xd8] sm:$0xff]
  %v53 = vld [vmem:[%s1 + $0xe0] sm:$0xff]
  %v54 = vld [vmem:[%s1 + $0xe8] sm:$0xff]
  %v55 = vld [vmem:[%s1 + $0xf0] sm:$0xff]
  %v56 = vld [vmem:[%s1 + $0xf8] sm:$0xff]
  %v57 = vld [vmem:[%s1 + $0x100] sm:$0xff]
  %v58 = vld [vmem:[%s1 + $0x108] sm:$0xff]
  %v59 = vld [vmem:[%s1 + $0x110] sm:$0xff]
  %v60 = vld [vmem:[%s1 + $0x118] sm:$0xff]
  %v61 = vld [vmem:[%s1 + $0x120] sm:$0xff]
  %v62 = vld [vmem:[%s1 + $0x128] sm:$0xff]
  %v63 = vld [vmem:[%s1 + $0x130] sm:$0xff]
  %v64 = vld [vmem:[%s1 + $0x138] sm:$0xff]
  %v65 = vld [vmem:[%s1 + $0x140] sm:$0xff]
  %v66 = vld [vmem:[%s1 + $0x148] sm:$0xff]
  %v67 = vld [vmem:[%s1 + $0x150] sm:$0xff]
  %v68 = vld [vmem:[%s1 + $0x158] sm:$0xff]
  %v69 = vld [vmem:[%s1 + $0x160] sm:$0xff]
  %v70 = vld [vmem:[%s1 + $0x168] sm:$0xff]
  %v71 = vld [vmem:[%s1 + $0x170] sm:$0xff]
  %v72 = vld [vmem:[%s1 + $0x178] sm:$0xff]
  %v73 = vld [vmem:[%s1 + $0x180] sm:$0xff]
  %v74 = vld [vmem:[%s1 + $0x188] sm:$0xff]
  %v75 = vld [vmem:[%s1 + $0x190] sm:$0xff]
  %v76 = vld [vmem:[%s1 + $0x198] sm:$0xff]
  %v77 = vld [vmem:[%s1 + $0x1a0] sm:$0xff]
  %v78 = vld [vmem:[%s1 + $0x1a8] sm:$0xff]
  %v79 = vld [vmem:[%s1 + $0x1b0] sm:$0xff]
  %v80 = vld [vmem:[%s1 + $0x1b8] sm:$0xff]
  %v81 = vld [vmem:[%s1 + $0x1c0] sm:$0xff]
  %v82 = vld [vmem:[%s1 + $0x1c8] sm:$0xff]
  %v83 = vld [vmem:[%s1 + $0x1d0] sm:$0xff]
  %v84 = vld [vmem:[%s1 + $0x1d8] sm:$0xff]
  %v85 = vld [vmem:[%s1 + $0x1e0] sm:$0xff]
  %v86 = vld [vmem:[%s1 + $0x1e8] sm:$0xff]
  %v87 = vld [vmem:[%s1 + $0x1f0] sm:$0xff]
  %v88 = vld [vmem:[%s1 + $0x1f8] sm:$0xff]
  %89 = vmatprep.subr.mxu0 %v56
  %90 = vmatpush1.msra.mxu0 %v55
  %91 = vmatprep.subr.mxu0 %v54
  %92 = vmatpush1.msra.mxu0 %v53
  %93 = vmatprep.subr.mxu0 %v52
  %94 = vmatpush1.msra.mxu0 %v51
  %95 = vmatprep.subr.mxu0 %v50
  %96 = vmatpush1.msra.mxu0 %v49
  %97 = vmatprep.subr.mxu0 %v48
  %98 = vmatpush1.msra.mxu0 %v47
  %99 = vmatprep.subr.mxu0 %v46
  %100 = vmatpush1.msra.mxu0 %v45
  %101 = vmatprep.subr.mxu0 %v44
  %102 = vmatpush1.msra.mxu0 %v43
  %103 = vmatprep.subr.mxu0 %v42
  %104 = vmatpush1.msra.mxu0 %v41
  %105 = vmatprep.subr.mxu0 %v40
  %106 = vmatpush1.msra.mxu0 %v39
  %107 = vmatprep.subr.mxu0 %v38
  %108 = vmatpush1.msra.mxu0 %v37
  %109 = vmatprep.subr.mxu0 %v36
  %110 = vmatpush1.msra.mxu0 %v35
  %111 = vmatprep.subr.mxu0 %v34
  %112 = vmatpush1.msra.mxu0 %v33
  %113 = vmatprep.subr.mxu0 %v32
  %114 = vmatpush1.msra.mxu0 %v31
  %115 = vmatprep.subr.mxu0 %v30
  %116 = vmatpush1.msra.mxu0 %v29
  %117 = vmatprep.subr.mxu0 %v28
  %118 = vmatpush1.msra.mxu0 %v27
  %119 = vmatprep.subr.mxu0 %v26
  %120 = vmatpush1.msra.mxu0 %v25
  %121 = vmatprep.subr.mxu0 %v88
  %122 = vmatpush2.msra.mxu0 %v87
  %123 = vmatprep.subr.mxu0 %v86
  %124 = vmatpush2.msra.mxu0 %v85
  %125 = vmatprep.subr.mxu0 %v84
  %126 = vmatpush2.msra.mxu0 %v83
  %127 = vmatprep.subr.mxu0 %v82
  %128 = vmatpush2.msra.mxu0 %v81
  %129 = vmatprep.subr.mxu0 %v80
  %130 = vmatpush2.msra.mxu0 %v79
  %131 = vmatprep.subr.mxu0 %v78
  %132 = vmatpush2.msra.mxu0 %v77
  %133 = vmatprep.subr.mxu0 %v76
  %134 = vmatpush2.msra.mxu0 %v75
  %135 = vmatprep.subr.mxu0 %v74
  %136 = vmatpush2.msra.mxu0 %v73
  %137 = vmatprep.subr.mxu0 %v72
  %138 = vmatpush2.msra.mxu0 %v71
  %139 = vmatprep.subr.mxu0 %v70
  %140 = vmatpush2.msra.mxu0 %v69
  %141 = vmatprep.subr.mxu0 %v68
  %142 = vmatpush2.msra.mxu0 %v67
  %143 = vmatprep.subr.mxu0 %v66
  %144 = vmatpush2.msra.mxu0 %v65
  %145 = vmatprep.subr.mxu0 %v64
  %146 = vmatpush2.msra.mxu0 %v63
  %147 = vmatprep.subr.mxu0 %v62
  %148 = vmatpush2.msra.mxu0 %v61
  %149 = vmatprep.subr.mxu0 %v60
  %150 = vmatpush2.msra.mxu0 %v59
  %151 = vmatprep.subr.mxu0 %v58
  %152 = vmatpush2.msra.mxu0 %v57
  %153 = vmatprep.mubr.f32.mxu0 %v18
  %154 = vmatmul.mubr.f32.gmra.mxu0 %v17
  %v155 = vpop.f32.mrf.mxu0
  %v156 = vadd.f32 0.0, %v155
  %v157 = vpop.f32.mrf.mxu0
  %v158 = vadd.f32 0.0, %v157
  %159 = vmatprep.mubr.f32.mxu0 %v20
  %160 = vmatmul.mubr.f32.gmra.mxu0 %v19
  %v161 = vpop.f32.mrf.mxu0
  %v162 = vadd.f32 0.0, %v161
  %v163 = vpop.f32.mrf.mxu0
  %v164 = vadd.f32 0.0, %v163
  %165 = vmatprep.mubr.f32.mxu0 %v22
  %166 = vmatmul.mubr.f32.gmra.mxu0 %v21
  %v167 = vpop.f32.mrf.mxu0
  %v168 = vadd.f32 0.0, %v167
  %v169 = vpop.f32.mrf.mxu0
  %v170 = vadd.f32 0.0, %v169
  %171 = vmatprep.mubr.f32.mxu0 %v24
  %172 = vmatmul.mubr.f32.gmra.mxu0 %v23
  %v173 = vpop.f32.mrf.mxu0
  %v174 = vadd.f32 0.0, %v173
  %v175 = vpop.f32.mrf.mxu0
  %v176 = vadd.f32 0.0, %v175
  %177 = vdwg.mxu0
  %v178 = vadd.f32 %v156, %v158
  %179 = vadd.xlane.f32.xlu0 %v178
  %v180 = vpop.xlane.xlu0 %179
  %v181 = vadd.f32 %v162, %v164
  %182 = vadd.xlane.f32.xlu0 %v181
  %v183 = vpop.xlane.xlu0 %182
  %v184 = vadd.f32 %v168, %v170
  %185 = vadd.xlane.f32.xlu0 %v184
  %v186 = vpop.xlane.xlu0 %185
  %v187 = vadd.f32 %v174, %v176
  %188 = vadd.xlane.f32.xlu0 %v187
  %v189 = vpop.xlane.xlu0 %188
  %v190 = vmul.f32 %v180, 0.00390625
  %v191 = vmul.f32 %v183, 0.00390625
  %v192 = vmul.f32 %v186, 0.00390625
  %v193 = vmul.f32 %v189, 0.00390625
  %v194 = vmul.f32 %v156, %v156
  %v195 = vmul.f32 %v158, %v158
  %v196 = vmul.f32 %v162, %v162
  %v197 = vmul.f32 %v164, %v164
  %v198 = vmul.f32 %v168, %v168
  %v199 = vmul.f32 %v170, %v170
  %v200 = vmul.f32 %v174, %v174
  %v201 = vmul.f32 %v176, %v176
  %v202 = vadd.f32 %v194, %v195
  %203 = vadd.xlane.f32.xlu0 %v202
  %v204 = vpop.xlane.xlu0 %203
  %v205 = vadd.f32 %v196, %v197
  %206 = vadd.xlane.f32.xlu0 %v205
  %v207 = vpop.xlane.xlu0 %206
  %v208 = vadd.f32 %v198, %v199
  %209 = vadd.xlane.f32.xlu0 %v208
  %v210 = vpop.xlane.xlu0 %209
  %v211 = vadd.f32 %v200, %v201
  %212 = vadd.xlane.f32.xlu0 %v211
  %v213 = vpop.xlane.xlu0 %212
  %v214 = vmul.f32 %v204, 0.00390625
  %v215 = vmul.f32 %v207, 0.00390625
  %v216 = vmul.f32 %v210, 0.00390625
  %v217 = vmul.f32 %v213, 0.00390625
  %v218 = vmul.f32 %v190, %v190
  %v219 = vmul.f32 %v191, %v191
  %v220 = vmul.f32 %v192, %v192
  %v221 = vmul.f32 %v193, %v193
  %v222 = vsub.f32 %v214, %v218
  %v223 = vsub.f32 %v215, %v219
  %v224 = vsub.f32 %v216, %v220
  %v225 = vsub.f32 %v217, %v221
  %v226 = vmax.f32 %v222, 0.0
  %v227 = vmax.f32 %v223, 0.0
  %v228 = vmax.f32 %v224, 0.0
  %v229 = vmax.f32 %v225, 0.0
  %v230 = vld [vmem:[%s2] sm:$0xff]
  %v231 = vld [vmem:[%s2 + $0x8] sm:$0xff]
  %v232 = vld [vmem:[%s2 + $0x10] sm:$0xff]
  %v233 = vld [vmem:[%s2 + $0x18] sm:$0xff]
  %v234 = vadd.f32 %v226, 1e-05
  %v235 = vadd.f32 %v227, 1e-05
  %v236 = vadd.f32 %v228, 1e-05
  %v237 = vadd.f32 %v229, 1e-05
  %v238 = vrsqrt.pop %v234
  %v239 = vrsqrt.pop %v235
  %v240 = vrsqrt.pop %v236
  %v241 = vrsqrt.pop %v237
  %v242 = vmul.f32 %v230, %v238
  %v243 = vmul.f32 %v231, %v239
  %v244 = vmul.f32 %v232, %v240
  %v245 = vmul.f32 %v233, %v241
  %v246 = vld [vmem:[%s3] sm:$0xff]
  %v247 = vld [vmem:[%s3 + $0x8] sm:$0xff]
  %v248 = vld [vmem:[%s3 + $0x10] sm:$0xff]
  %v249 = vld [vmem:[%s3 + $0x18] sm:$0xff]
  %v250 = vmul.f32 %v190, %v242
  %v251 = vmul.f32 %v191, %v243
  %v252 = vmul.f32 %v192, %v244
  %v253 = vmul.f32 %v193, %v245
  %v254 = vsub.f32 %v246, %v250
  %v255 = vsub.f32 %v247, %v251
  %v256 = vsub.f32 %v248, %v252
  %v257 = vsub.f32 %v249, %v253
  %259 = vset.pattern.permute.xlu0 0
  %260 = vperm.xlu0 %259, %v242
  %v261 = vpop.permute.xlu0 %260
  %264 = vset.pattern.permute.xlu0 0
  %265 = vperm.xlu0 %264, %v243
  %v266 = vpop.permute.xlu0 %265
  %269 = vset.pattern.permute.xlu0 0
  %270 = vperm.xlu0 %269, %v244
  %v271 = vpop.permute.xlu0 %270
  %274 = vset.pattern.permute.xlu0 0
  %275 = vperm.xlu0 %274, %v245
  %v276 = vpop.permute.xlu0 %275
  %v278 = vmul.f32 %v156, %v261
  %v279 = vmul.f32 %v158, %v261
  %v280 = vmul.f32 %v162, %v266
  %v281 = vmul.f32 %v164, %v266
  %v282 = vmul.f32 %v168, %v271
  %v283 = vmul.f32 %v170, %v271
  %v284 = vmul.f32 %v174, %v276
  %v285 = vmul.f32 %v176, %v276
  %287 = vset.pattern.permute.xlu0 0
  %288 = vperm.xlu0 %287, %v254
  %v289 = vpop.permute.xlu0 %288
  %292 = vset.pattern.permute.xlu0 0
  %293 = vperm.xlu0 %292, %v255
  %v294 = vpop.permute.xlu0 %293
  %297 = vset.pattern.permute.xlu0 0
  %298 = vperm.xlu0 %297, %v256
  %v299 = vpop.permute.xlu0 %298
  %302 = vset.pattern.permute.xlu0 0
  %303 = vperm.xlu0 %302, %v257
  %v304 = vpop.permute.xlu0 %303
  %v306 = vadd.f32 %v278, %v289
  %v307 = vadd.f32 %v279, %v289
  %v308 = vadd.f32 %v280, %v294
  %v309 = vadd.f32 %v281, %v294
  %v310 = vadd.f32 %v282, %v299
  %v311 = vadd.f32 %v283, %v299
  %v312 = vadd.f32 %v284, %v304
  %v313 = vadd.f32 %v285, %v304
  %v314 = vmax.f32 %v306, 0.0
  %v315 = vmax.f32 %v307, 0.0
  %v316 = vmax.f32 %v308, 0.0
  %v317 = vmax.f32 %v309, 0.0
  %v318 = vmax.f32 %v310, 0.0
  %v319 = vmax.f32 %v311, 0.0
  %v320 = vmax.f32 %v312, 0.0
  %v321 = vmax.f32 %v313, 0.0
  %322 = vst [vmem:[%s4] sm:$0xff] %v314
  %323 = vst [vmem:[%s4 + $0x8] sm:$0xff] %v315
  %324 = vst [vmem:[%s4 + $0x10] sm:$0xff] %v316
  %325 = vst [vmem:[%s4 + $0x18] sm:$0xff] %v317
  %326 = vst [vmem:[%s4 + $0x20] sm:$0xff] %v318
  %327 = vst [vmem:[%s4 + $0x28] sm:$0xff] %v319
  %328 = vst [vmem:[%s4 + $0x30] sm:$0xff] %v320
  %329 = vst [vmem:[%s4 + $0x38] sm:$0xff] %v321
  // Predicated region
  $region18: #{_lambda_.5} parent=0 // pred_check
    _
  $region19: #{_lambda_.5} parent=0 // pred_check_branch
    %331 = sbr.rel (0) target = $region21
  $region20: #{_lambda_.5} parent=0 // pred_region
    _
  $region21: #{_lambda_.5} parent=0 // pred_fallthru
    _
  // Predicated region
  $region22: #{_lambda_.5} parent=0 // pred_check
    _
  $region23: #{_lambda_.5} parent=0 // pred_check_branch
    %333 = sbr.rel (0) target = $region25
  $region24: #{_lambda_.5} parent=0 // pred_region
    _
  $region25: #{_lambda_.5} parent=0 // pred_fallthru
    _

</llo_original>
